<compile_context>
chip_gen: v5e
topology: v5e:2x2
jax: 0.10.0
libtpu: 0.0.40
codegen_flags: <defaults>
</compile_context>

<pallas_src>
import re
import numpy as np
import jax
import jax.numpy as jnp
from jax.experimental import pallas as pl
from jax.experimental.pallas import tpu as pltpu

# ---------------- DeformationNetwork hyper-parameters (mode='glob_only') ----------------
LAT_DIM_EXPR = 16
LAT_DIM_GLOB = 16
LAT_DIM_LOC = 16                              # present in lat_rep, unused by glob_only cond
LAT_FULL = LAT_DIM_GLOB + LAT_DIM_LOC + LAT_DIM_EXPR   # 48
HIDDEN_DIM = 64
NLAYERS = 8
OUT_DIM_SDF = 4                               # pred[..., :3] offsets, pred[..., -1:] feature
INPUT_DIM = 3
BETA = 100.0                                  # Softplus beta (PyTorch threshold = 20)

LAT_DIM = LAT_DIM_GLOB + LAT_DIM_EXPR         # glob_only: self.lat_dim = 32
D_IN = LAT_DIM + INPUT_DIM                    # DeepSDF input dim = 35
DIMS = [D_IN] + [HIDDEN_DIM] * NLAYERS + [OUT_DIM_SDF]
NUM_LAYERS = len(DIMS)
SKIP_IN = (NLAYERS // 2,)                     # (4,)
SKIP_LAYER = NLAYERS // 2                     # 4
NUM_LIN = NUM_LAYERS - 1                      # 9 linear layers

INV_SQRT2 = np.float32(1.0 / np.sqrt(2.0))


def _points_per_lane_row():
    """Block-diagonal MXU packing factor, chosen per TPU generation.

    v6e/v7x MXUs are 256x256 -> pack 4 points per lane row (weights become 256-wide
    block-diagonal).  v2-v5 MXUs are 128x128 -> pack 2 so no issued pass is all-zero.
    """
    try:
        kind = jax.devices()[0].device_kind.lower()
    except Exception:
        return 4
    nums = re.findall(r"\d+", kind)
    gen = int(nums[0]) if nums else 0
    return 4 if gen >= 6 else 2


PACK = _points_per_lane_row()                 # points packed per lane row
TM_UNIT = 8 * PACK                            # legality: (TM // PACK) % 8 == 0
TM_MAX = 2048                                 # max points per grid step
GRID_MIN_STEPS = 8                            # target >= 8 grid steps (2 TCs on v7x)
assert TM_MAX % TM_UNIT == 0


def _softplus_beta(x, beta=BETA):
    # PyTorch nn.Softplus(beta): (1/beta) * log1p(exp(beta*x)), linear above threshold 20.
    bx = x * beta
    safe = jnp.minimum(bx, 20.0)
    return jnp.where(bx > 20.0, x, jnp.log1p(jnp.exp(safe)) * np.float32(1.0 / beta))


# ---------------- Pallas kernel: packed DeepSDF MLP on one tile of points ----------------
def deepsdf_packed_kernel(xyz_ref, lat_ref, wxyz_ref, wlat_ref, whid_ref,
                          wout_ref, bhid_ref, bout_ref, out_ref):
    # xyz_ref:  (TMP, PACK*3)          -- PACK points per row
    # lat_ref:  (TMP, PACK*48)
    # wxyz_ref: (2, PACK*3,  PACK*64)  f32  layer-0 / layer-4 xyz partial weights (block-diag)
    # wlat_ref: (2, PACK*48, PACK*64)  f32  layer-0 / layer-4 lat partial weights (loc zeroed)
    # whid_ref: (7, PACK*64, PACK*64)  bf16 x-path weights, layers 1..7 (1/sqrt2 folded in L4)
    # wout_ref: (PACK*64, PACK*4)      f32  final layer
    # bhid_ref: (8, 1, PACK*64) f32;   bout_ref: (1, PACK*4) f32

    # layer 0: inp = [xyz, glob, expr] assembled implicitly via f32 partial dots
    x = (jnp.dot(xyz_ref[...], wxyz_ref[0], preferred_element_type=jnp.float32)
         + jnp.dot(lat_ref[...], wlat_ref[0], preferred_element_type=jnp.float32)
         + bhid_ref[0])
    x = _softplus_beta(x)

    for layer in range(1, NLAYERS):                       # layers 1..7
        # bf16 operands, f32 accumulation on the MXU.  Padded zero rows of the
        # skip-layer x-path weight are exact zeros in bf16 as well.
        h = jnp.dot(x.astype(jnp.bfloat16), whid_ref[layer - 1],
                    preferred_element_type=jnp.float32)
        if layer == SKIP_LAYER:
            # skip: cat([x, inp]) / sqrt(2) @ W4  ==  x@(W4a/sqrt2) + inp@(W4b/sqrt2)
            # xyz/lat tiles are re-read from VMEM here (not held live since layer 0).
            h = h + jnp.dot(xyz_ref[...], wxyz_ref[1], preferred_element_type=jnp.float32)
            h = h + jnp.dot(lat_ref[...], wlat_ref[1], preferred_element_type=jnp.float32)
        x = _softplus_beta(h + bhid_ref[layer])

    out = jnp.dot(x, wout_ref[...], preferred_element_type=jnp.float32) + bout_ref[...]
    out_ref[...] = out.astype(out_ref.dtype)


# ---------------- parameter init (deterministic, PyTorch-Linear-like uniform) ----------------
def init_params(key):
    ws, bs = [], []
    for layer in range(NUM_LIN):
        in_dim = DIMS[layer]
        out_dim = DIMS[layer + 1] - D_IN if (layer + 1) in SKIP_IN else DIMS[layer + 1]
        key, kw, kb = jax.random.split(key, 3)
        bound = 1.0 / np.sqrt(in_dim)
        ws.append(jax.random.uniform(kw, (in_dim, out_dim), jnp.float32, -bound, bound))
        bs.append(jax.random.uniform(kb, (1, out_dim), jnp.float32, -bound, bound))
    return ws, bs


# ---------------- host-side weight prep: split / pad / fold sqrt2 / block-diag pack ----------
def _block_diag(w):
    k, n = w.shape
    out = jnp.zeros((PACK * k, PACK * n), w.dtype)
    for i in range(PACK):
        out = out.at[i * k:(i + 1) * k, i * n:(i + 1) * n].set(w)
    return out


def _pad_to(w, rows, cols):
    return jnp.zeros((rows, cols), jnp.float32).at[:w.shape[0], :w.shape[1]].set(w)


def _lat_embed(w_glob, w_expr):
    # (48, 64): rows 0:16 <- glob weights, rows 32:48 <- expr weights, loc rows zero.
    z = jnp.zeros((LAT_FULL, HIDDEN_DIM), jnp.float32)
    z = z.at[:LAT_DIM_GLOB].set(w_glob)
    z = z.at[LAT_FULL - LAT_DIM_EXPR:].set(w_expr)
    return z


def prepare_packed_params(ws, bs):
    w0, w4 = ws[0], ws[4]                                     # (35,64), (64,64)
    skip_w = DIMS[SKIP_LAYER] - D_IN                          # 29 (x width entering layer 4)

    w_xyz0 = w0[:INPUT_DIM]                                   # (3, 64)
    w_lat0 = _lat_embed(w0[INPUT_DIM:INPUT_DIM + LAT_DIM_GLOB],
                        w0[INPUT_DIM + LAT_DIM_GLOB:D_IN])
    w_xyz4 = w4[skip_w:skip_w + INPUT_DIM] * INV_SQRT2        # (3, 64)
    w_lat4 = _lat_embed(w4[skip_w + INPUT_DIM:skip_w + INPUT_DIM + LAT_DIM_GLOB] * INV_SQRT2,
                        w4[skip_w + INPUT_DIM + LAT_DIM_GLOB:] * INV_SQRT2)

    # x-path of the skip layer: rows skip_w:64 are exactly zero (padding invariant).
    w4a = _pad_to(w4[:skip_w] * INV_SQRT2, HIDDEN_DIM, HIDDEN_DIM)
    hid = [ws[1], ws[2], _pad_to(ws[3], HIDDEN_DIM, HIDDEN_DIM), w4a, ws[5], ws[6], ws[7]]

    w_xyz_p = jnp.stack([_block_diag(w_xyz0), _block_diag(w_xyz4)])   # (2, P*3, P*64) f32
    w_lat_p = jnp.stack([_block_diag(w_lat0), _block_diag(w_lat4)])   # (2, P*48, P*64) f32
    w_hid_p = jnp.stack([_block_diag(w) for w in hid]).astype(jnp.bfloat16)  # (7,P*64,P*64)
    w_out_p = _block_diag(ws[8])                                      # (P*64, P*4) f32

    b_hid = []
    for l in range(NLAYERS):                                          # layers 0..7
        bpad = jnp.zeros((1, HIDDEN_DIM), jnp.float32).at[:, :bs[l].shape[1]].set(bs[l])
        b_hid.append(jnp.tile(bpad, (1, PACK)))
    b_hid_p = jnp.stack(b_hid)                                        # (8, 1, P*64)
    b_out_p = jnp.tile(bs[NUM_LIN - 1], (1, PACK))                    # (1, P*4)
    return w_xyz_p, w_lat_p, w_hid_p, w_out_p, b_hid_p, b_out_p


# ---------------- adaptive tile size ----------------
def _choose_tm(m):
    """Points per grid step: keep >= ~GRID_MIN_STEPS steps, capped at TM_MAX."""
    tm = max(TM_UNIT, -(-m // GRID_MIN_STEPS))        # ceil(m / GRID_MIN_STEPS)
    tm = -(-tm // TM_UNIT) * TM_UNIT                  # round up to legality unit
    return min(TM_MAX, tm)


# ---------------- wrapper: glob_only cond handled implicitly + pallas_call ----------------
@jax.jit
def deformation_network_forward(xyz, lat_rep, packed_params):
    """xyz: (B, N, 3), lat_rep: (B, N, 48) as [glob, loc, expr].
    Returns (offsets (B,N,3), feat (B,N,1))."""
    w_xyz_p, w_lat_p, w_hid_p, w_out_p, b_hid_p, b_out_p = packed_params
    if xyz.ndim == 2:
        xyz = xyz[None]
    if lat_rep.ndim == 2:
        lat_rep = lat_rep[None]
    assert lat_rep.shape[-1] == LAT_FULL, "lat_rep must be [glob(16), loc(16), expr(16)]"
    B, N, _ = xyz.shape
    M = B * N
    TM = _choose_tm(M)
    TMP = TM // PACK
    M_pad = ((M + TM - 1) // TM) * TM

    xyz_flat = xyz.reshape(M, INPUT_DIM).astype(jnp.float32)
    lat_flat = lat_rep.reshape(M, LAT_FULL).astype(jnp.float32)
    pad = M_pad - M
    if pad:
        xyz_flat = jnp.pad(xyz_flat, ((0, pad), (0, 0)))
        lat_flat = jnp.pad(lat_flat, ((0, pad), (0, 0)))

    # row-major PACK-way point packing (host-side; no in-kernel relayout)
    xyz_p = xyz_flat.reshape(M_pad // PACK, PACK * INPUT_DIM)
    lat_p = lat_flat.reshape(M_pad // PACK, PACK * LAT_FULL)

    # advisory cost estimate so XLA schedules surrounding ops sensibly
    macs_per_point = (D_IN * HIDDEN_DIM                           # layer 0
                      + (NLAYERS - 1) * HIDDEN_DIM * HIDDEN_DIM   # layers 1..7 x-path
                      + D_IN * HIDDEN_DIM                         # skip re-injection
                      + HIDDEN_DIM * OUT_DIM_SDF)                 # output layer
    bytes_w = sum(int(np.prod(a.shape)) * a.dtype.itemsize
                  for a in (w_xyz_p, w_lat_p, w_hid_p, w_out_p, b_hid_p, b_out_p))
    cost = pl.CostEstimate(
        flops=int(2 * macs_per_point * M_pad),
        transcendentals=int(2 * NLAYERS * HIDDEN_DIM * M_pad),
        bytes_accessed=int(4 * M_pad * (INPUT_DIM + LAT_FULL + OUT_DIM_SDF) + bytes_w))

    out_p = pl.pallas_call(
        deepsdf_packed_kernel,
        out_shape=jax.ShapeDtypeStruct((M_pad // PACK, PACK * OUT_DIM_SDF), jnp.float32),
        grid_spec=pltpu.PrefetchScalarGridSpec(
            num_scalar_prefetch=0,
            grid=(M_pad // TM,),
            in_specs=[
                pl.BlockSpec((TMP, PACK * INPUT_DIM), lambda i: (i, 0)),
                pl.BlockSpec((TMP, PACK * LAT_FULL), lambda i: (i, 0)),
                pl.BlockSpec(w_xyz_p.shape, lambda i: (0, 0, 0)),
                pl.BlockSpec(w_lat_p.shape, lambda i: (0, 0, 0)),
                pl.BlockSpec(w_hid_p.shape, lambda i: (0, 0, 0)),
                pl.BlockSpec(w_out_p.shape, lambda i: (0, 0)),
                pl.BlockSpec(b_hid_p.shape, lambda i: (0, 0, 0)),
                pl.BlockSpec(b_out_p.shape, lambda i: (0, 0)),
            ],
            out_specs=pl.BlockSpec((TMP, PACK * OUT_DIM_SDF), lambda i: (i, 0)),
        ),
        compiler_params=pltpu.CompilerParams(dimension_semantics=("parallel",)),
        cost_estimate=cost,
    )(xyz_p, lat_p, w_xyz_p, w_lat_p, w_hid_p, w_out_p, b_hid_p, b_out_p)

    pred = out_p.reshape(M_pad, OUT_DIM_SDF)[:M].reshape(B, N, OUT_DIM_SDF)
    return pred[..., :3], pred[..., -1:]


# ---------------- pure-JAX reference (original concat-based float32 semantics) ----------------
def deepsdf_ref(inp, ws, bs):
    x = inp
    for layer in range(NUM_LIN):
        if layer in SKIP_IN:
            x = jnp.concatenate([x, inp], axis=-1) / np.sqrt(2.0)
        x = jnp.dot(x, ws[layer], precision=jax.lax.Precision.HIGHEST) + bs[layer]
        if layer < NUM_LIN - 1:
            x = _softplus_beta(x)
    return x


if __name__ == "__main__":
    key = jax.random.PRNGKey(0)
    kx, kl, kp = jax.random.split(key, 3)

    B, N = 2, 333                                 # deliberately not a multiple of TM or PACK
    xyz = jax.random.normal(kx, (B, N, INPUT_DIM), dtype=jnp.float32)
    lat_rep = jax.random.normal(kl, (B, N, LAT_FULL), dtype=jnp.float32)
    ws, bs = init_params(kp)
    packed = prepare_packed_params(ws, bs)

    offsets, feats = deformation_network_forward(xyz, lat_rep, packed)
    jax.block_until_ready((offsets, feats))

    # reference check against the original (concat-based) float32 semantics
    cond = jnp.concatenate([lat_rep[:, :, :LAT_DIM_GLOB], lat_rep[..., -LAT_DIM_EXPR:]], -1)
    inp = jnp.concatenate([xyz, cond], -1).reshape(B * N, D_IN)
    ref = deepsdf_ref(inp, ws, bs).reshape(B, N, OUT_DIM_SDF)
    np.testing.assert_allclose(np.asarray(offsets), np.asarray(ref[..., :3]),
                               rtol=2e-3, atol=2e-3)
    np.testing.assert_allclose(np.asarray(feats), np.asarray(ref[..., -1:]),
                               rtol=2e-3, atol=2e-3)

    print("KERNEL_OK")
</pallas_src>

<mosaic_0001>
module attributes {stable_mosaic.version = 11 : i64} {
  func.func @deepsdf_packed_kernel(%arg0: i32, %arg1: memref<48x6xf32, #tpu.memory_space<vmem>>, %arg2: memref<48x96xf32, #tpu.memory_space<vmem>>, %arg3: memref<2x6x128xf32, #tpu.memory_space<vmem>>, %arg4: memref<2x96x128xf32, #tpu.memory_space<vmem>>, %arg5: memref<7x128x128xbf16, #tpu.memory_space<vmem>>, %arg6: memref<128x8xf32, #tpu.memory_space<vmem>>, %arg7: memref<8x1x128xf32, #tpu.memory_space<vmem>>, %arg8: memref<1x8xf32, #tpu.memory_space<vmem>>, %arg9: memref<48x8xf32, #tpu.memory_space<vmem>>) attributes {dimension_semantics = [#tpu.dimension_semantics<parallel>], iteration_bounds = array<i64: 7>, scalar_prefetch = 0 : i64, scratch_operands = 0 : i64, tpu.core_type = #tpu.core_type<tc>, window_params = [{transform_indices = @transform_0, window_bounds = array<i64: 48, 6>}, {transform_indices = @transform_1, window_bounds = array<i64: 48, 96>}, {pipeline_mode = #tpu.pipeline_mode<synchronous>, transform_indices = @transform_2, window_bounds = array<i64: 2, 6, 128>}, {pipeline_mode = #tpu.pipeline_mode<synchronous>, transform_indices = @transform_3, window_bounds = array<i64: 2, 96, 128>}, {pipeline_mode = #tpu.pipeline_mode<synchronous>, transform_indices = @transform_4, window_bounds = array<i64: 7, 128, 128>}, {pipeline_mode = #tpu.pipeline_mode<synchronous>, transform_indices = @transform_5, window_bounds = array<i64: 128, 8>}, {pipeline_mode = #tpu.pipeline_mode<synchronous>, transform_indices = @transform_6, window_bounds = array<i64: 8, 1, 128>}, {pipeline_mode = #tpu.pipeline_mode<synchronous>, transform_indices = @transform_7, window_bounds = array<i64: 1, 8>}, {transform_indices = @transform_8, window_bounds = array<i64: 48, 8>}]} {
    %c0 = arith.constant 0 : index
    %c0_0 = arith.constant 0 : index
    %0 = vector.load %arg1[%c0, %c0_0] : memref<48x6xf32, #tpu.memory_space<vmem>>, vector<48x6xf32>
    %c0_1 = arith.constant 0 : index
    %c0_2 = arith.constant 0 : index
    %c0_3 = arith.constant 0 : index
    %1 = vector.load %arg3[%c0_1, %c0_2, %c0_3] : memref<2x6x128xf32, #tpu.memory_space<vmem>>, vector<1x6x128xf32>
    %2 = vector.shape_cast %1 : vector<1x6x128xf32> to vector<6x128xf32>
    %cst = arith.constant dense<0.000000e+00> : vector<48x128xf32>
    %3 = tpu.matmul %0, %2, %cst {dimension_numbers = #tpu.dot_dimension_numbers<[1], [0], [0], [1], [0, 0, 1, 1], [], []>} : vector<48x6xf32>, vector<6x128xf32>, vector<48x128xf32> -> vector<48x128xf32>
    %c0_4 = arith.constant 0 : index
    %c0_5 = arith.constant 0 : index
    %4 = vector.load %arg2[%c0_4, %c0_5] : memref<48x96xf32, #tpu.memory_space<vmem>>, vector<48x96xf32>
    %c0_6 = arith.constant 0 : index
    %c0_7 = arith.constant 0 : index
    %c0_8 = arith.constant 0 : index
    %5 = vector.load %arg4[%c0_6, %c0_7, %c0_8] : memref<2x96x128xf32, #tpu.memory_space<vmem>>, vector<1x96x128xf32>
    %6 = vector.shape_cast %5 : vector<1x96x128xf32> to vector<96x128xf32>
    %cst_9 = arith.constant dense<0.000000e+00> : vector<48x128xf32>
    %7 = tpu.matmul %4, %6, %cst_9 {dimension_numbers = #tpu.dot_dimension_numbers<[1], [0], [0], [1], [0, 0, 1, 1], [], []>} : vector<48x96xf32>, vector<96x128xf32>, vector<48x128xf32> -> vector<48x128xf32>
    %8 = arith.addf %3, %7 : vector<48x128xf32>
    %c0_10 = arith.constant 0 : index
    %c0_11 = arith.constant 0 : index
    %c0_12 = arith.constant 0 : index
    %9 = vector.load %arg7[%c0_10, %c0_11, %c0_12] : memref<8x1x128xf32, #tpu.memory_space<vmem>>, vector<1x1x128xf32>
    %10 = vector.shape_cast %9 : vector<1x1x128xf32> to vector<1x128xf32>
    %11 = vector.broadcast %10 : vector<1x128xf32> to vector<48x128xf32>
    %12 = arith.addf %8, %11 : vector<48x128xf32>
    %cst_13 = arith.constant 1.000000e+02 : f32
    %13 = vector.broadcast %cst_13 : f32 to vector<48x128xf32>
    %14 = arith.mulf %12, %13 : vector<48x128xf32>
    %cst_14 = arith.constant 2.000000e+01 : f32
    %15 = vector.broadcast %cst_14 : f32 to vector<48x128xf32>
    %16 = arith.minimumf %14, %15 : vector<48x128xf32>
    %cst_15 = arith.constant 2.000000e+01 : f32
    %17 = vector.broadcast %cst_15 : f32 to vector<48x128xf32>
    %18 = arith.cmpf ogt, %14, %17 : vector<48x128xf32>
    %19 = math.exp %16 : vector<48x128xf32>
    %20 = math.log1p %19 : vector<48x128xf32>
    %cst_16 = arith.constant 0.00999999977 : f32
    %21 = vector.broadcast %cst_16 : f32 to vector<48x128xf32>
    %22 = arith.mulf %20, %21 : vector<48x128xf32>
    %23 = arith.select %18, %12, %22 : vector<48x128xi1>, vector<48x128xf32>
    %24 = arith.truncf %23 : vector<48x128xf32> to vector<48x128xbf16>
    %c0_17 = arith.constant 0 : index
    %c0_18 = arith.constant 0 : index
    %c0_19 = arith.constant 0 : index
    %25 = vector.load %arg5[%c0_17, %c0_18, %c0_19] : memref<7x128x128xbf16, #tpu.memory_space<vmem>>, vector<1x128x128xbf16>
    %26 = vector.shape_cast %25 : vector<1x128x128xbf16> to vector<128x128xbf16>
    %cst_20 = arith.constant dense<0.000000e+00> : vector<48x128xf32>
    %27 = tpu.matmul %24, %26, %cst_20 {dimension_numbers = #tpu.dot_dimension_numbers<[1], [0], [0], [1], [0, 0, 1, 1], [], []>} : vector<48x128xbf16>, vector<128x128xbf16>, vector<48x128xf32> -> vector<48x128xf32>
    %c1 = arith.constant 1 : index
    %c0_21 = arith.constant 0 : index
    %c0_22 = arith.constant 0 : index
    %28 = vector.load %arg7[%c1, %c0_21, %c0_22] : memref<8x1x128xf32, #tpu.memory_space<vmem>>, vector<1x1x128xf32>
    %29 = vector.shape_cast %28 : vector<1x1x128xf32> to vector<1x128xf32>
    %30 = vector.broadcast %29 : vector<1x128xf32> to vector<48x128xf32>
    %31 = arith.addf %27, %30 : vector<48x128xf32>
    %cst_23 = arith.constant 1.000000e+02 : f32
    %32 = vector.broadcast %cst_23 : f32 to vector<48x128xf32>
    %33 = arith.mulf %31, %32 : vector<48x128xf32>
    %cst_24 = arith.constant 2.000000e+01 : f32
    %34 = vector.broadcast %cst_24 : f32 to vector<48x128xf32>
    %35 = arith.minimumf %33, %34 : vector<48x128xf32>
    %cst_25 = arith.constant 2.000000e+01 : f32
    %36 = vector.broadcast %cst_25 : f32 to vector<48x128xf32>
    %37 = arith.cmpf ogt, %33, %36 : vector<48x128xf32>
    %38 = math.exp %35 : vector<48x128xf32>
    %39 = math.log1p %38 : vector<48x128xf32>
    %cst_26 = arith.constant 0.00999999977 : f32
    %40 = vector.broadcast %cst_26 : f32 to vector<48x128xf32>
    %41 = arith.mulf %39, %40 : vector<48x128xf32>
    %42 = arith.select %37, %31, %41 : vector<48x128xi1>, vector<48x128xf32>
    %43 = arith.truncf %42 : vector<48x128xf32> to vector<48x128xbf16>
    %c1_27 = arith.constant 1 : index
    %c0_28 = arith.constant 0 : index
    %c0_29 = arith.constant 0 : index
    %44 = vector.load %arg5[%c1_27, %c0_28, %c0_29] : memref<7x128x128xbf16, #tpu.memory_space<vmem>>, vector<1x128x128xbf16>
    %45 = vector.shape_cast %44 : vector<1x128x128xbf16> to vector<128x128xbf16>
    %cst_30 = arith.constant dense<0.000000e+00> : vector<48x128xf32>
    %46 = tpu.matmul %43, %45, %cst_30 {dimension_numbers = #tpu.dot_dimension_numbers<[1], [0], [0], [1], [0, 0, 1, 1], [], []>} : vector<48x128xbf16>, vector<128x128xbf16>, vector<48x128xf32> -> vector<48x128xf32>
    %c2 = arith.constant 2 : index
    %c0_31 = arith.constant 0 : index
    %c0_32 = arith.constant 0 : index
    %47 = vector.load %arg7[%c2, %c0_31, %c0_32] : memref<8x1x128xf32, #tpu.memory_space<vmem>>, vector<1x1x128xf32>
    %48 = vector.shape_cast %47 : vector<1x1x128xf32> to vector<1x128xf32>
    %49 = vector.broadcast %48 : vector<1x128xf32> to vector<48x128xf32>
    %50 = arith.addf %46, %49 : vector<48x128xf32>
    %cst_33 = arith.constant 1.000000e+02 : f32
    %51 = vector.broadcast %cst_33 : f32 to vector<48x128xf32>
    %52 = arith.mulf %50, %51 : vector<48x128xf32>
    %cst_34 = arith.constant 2.000000e+01 : f32
    %53 = vector.broadcast %cst_34 : f32 to vector<48x128xf32>
    %54 = arith.minimumf %52, %53 : vector<48x128xf32>
    %cst_35 = arith.constant 2.000000e+01 : f32
    %55 = vector.broadcast %cst_35 : f32 to vector<48x128xf32>
    %56 = arith.cmpf ogt, %52, %55 : vector<48x128xf32>
    %57 = math.exp %54 : vector<48x128xf32>
    %58 = math.log1p %57 : vector<48x128xf32>
    %cst_36 = arith.constant 0.00999999977 : f32
    %59 = vector.broadcast %cst_36 : f32 to vector<48x128xf32>
    %60 = arith.mulf %58, %59 : vector<48x128xf32>
    %61 = arith.select %56, %50, %60 : vector<48x128xi1>, vector<48x128xf32>
    %62 = arith.truncf %61 : vector<48x128xf32> to vector<48x128xbf16>
    %c2_37 = arith.constant 2 : index
    %c0_38 = arith.constant 0 : index
    %c0_39 = arith.constant 0 : index
    %63 = vector.load %arg5[%c2_37, %c0_38, %c0_39] : memref<7x128x128xbf16, #tpu.memory_space<vmem>>, vector<1x128x128xbf16>
    %64 = vector.shape_cast %63 : vector<1x128x128xbf16> to vector<128x128xbf16>
    %cst_40 = arith.constant dense<0.000000e+00> : vector<48x128xf32>
    %65 = tpu.matmul %62, %64, %cst_40 {dimension_numbers = #tpu.dot_dimension_numbers<[1], [0], [0], [1], [0, 0, 1, 1], [], []>} : vector<48x128xbf16>, vector<128x128xbf16>, vector<48x128xf32> -> vector<48x128xf32>
    %c3 = arith.constant 3 : index
    %c0_41 = arith.constant 0 : index
    %c0_42 = arith.constant 0 : index
    %66 = vector.load %arg7[%c3, %c0_41, %c0_42] : memref<8x1x128xf32, #tpu.memory_space<vmem>>, vector<1x1x128xf32>
    %67 = vector.shape_cast %66 : vector<1x1x128xf32> to vector<1x128xf32>
    %68 = vector.broadcast %67 : vector<1x128xf32> to vector<48x128xf32>
    %69 = arith.addf %65, %68 : vector<48x128xf32>
    %cst_43 = arith.constant 1.000000e+02 : f32
    %70 = vector.broadcast %cst_43 : f32 to vector<48x128xf32>
    %71 = arith.mulf %69, %70 : vector<48x128xf32>
    %cst_44 = arith.constant 2.000000e+01 : f32
    %72 = vector.broadcast %cst_44 : f32 to vector<48x128xf32>
    %73 = arith.minimumf %71, %72 : vector<48x128xf32>
    %cst_45 = arith.constant 2.000000e+01 : f32
    %74 = vector.broadcast %cst_45 : f32 to vector<48x128xf32>
    %75 = arith.cmpf ogt, %71, %74 : vector<48x128xf32>
    %76 = math.exp %73 : vector<48x128xf32>
    %77 = math.log1p %76 : vector<48x128xf32>
    %cst_46 = arith.constant 0.00999999977 : f32
    %78 = vector.broadcast %cst_46 : f32 to vector<48x128xf32>
    %79 = arith.mulf %77, %78 : vector<48x128xf32>
    %80 = arith.select %75, %69, %79 : vector<48x128xi1>, vector<48x128xf32>
    %81 = arith.truncf %80 : vector<48x128xf32> to vector<48x128xbf16>
    %c3_47 = arith.constant 3 : index
    %c0_48 = arith.constant 0 : index
    %c0_49 = arith.constant 0 : index
    %82 = vector.load %arg5[%c3_47, %c0_48, %c0_49] : memref<7x128x128xbf16, #tpu.memory_space<vmem>>, vector<1x128x128xbf16>
    %83 = vector.shape_cast %82 : vector<1x128x128xbf16> to vector<128x128xbf16>
    %cst_50 = arith.constant dense<0.000000e+00> : vector<48x128xf32>
    %84 = tpu.matmul %81, %83, %cst_50 {dimension_numbers = #tpu.dot_dimension_numbers<[1], [0], [0], [1], [0, 0, 1, 1], [], []>} : vector<48x128xbf16>, vector<128x128xbf16>, vector<48x128xf32> -> vector<48x128xf32>
    %c0_51 = arith.constant 0 : index
    %c0_52 = arith.constant 0 : index
    %85 = vector.load %arg1[%c0_51, %c0_52] : memref<48x6xf32, #tpu.memory_space<vmem>>, vector<48x6xf32>
    %c1_53 = arith.constant 1 : index
    %c0_54 = arith.constant 0 : index
    %c0_55 = arith.constant 0 : index
    %86 = vector.load %arg3[%c1_53, %c0_54, %c0_55] : memref<2x6x128xf32, #tpu.memory_space<vmem>>, vector<1x6x128xf32>
    %87 = vector.shape_cast %86 : vector<1x6x128xf32> to vector<6x128xf32>
    %cst_56 = arith.constant dense<0.000000e+00> : vector<48x128xf32>
    %88 = tpu.matmul %85, %87, %cst_56 {dimension_numbers = #tpu.dot_dimension_numbers<[1], [0], [0], [1], [0, 0, 1, 1], [], []>} : vector<48x6xf32>, vector<6x128xf32>, vector<48x128xf32> -> vector<48x128xf32>
    %89 = arith.addf %84, %88 : vector<48x128xf32>
    %c0_57 = arith.constant 0 : index
    %c0_58 = arith.constant 0 : index
    %90 = vector.load %arg2[%c0_57, %c0_58] : memref<48x96xf32, #tpu.memory_space<vmem>>, vector<48x96xf32>
    %c1_59 = arith.constant 1 : index
    %c0_60 = arith.constant 0 : index
    %c0_61 = arith.constant 0 : index
    %91 = vector.load %arg4[%c1_59, %c0_60, %c0_61] : memref<2x96x128xf32, #tpu.memory_space<vmem>>, vector<1x96x128xf32>
    %92 = vector.shape_cast %91 : vector<1x96x128xf32> to vector<96x128xf32>
    %cst_62 = arith.constant dense<0.000000e+00> : vector<48x128xf32>
    %93 = tpu.matmul %90, %92, %cst_62 {dimension_numbers = #tpu.dot_dimension_numbers<[1], [0], [0], [1], [0, 0, 1, 1], [], []>} : vector<48x96xf32>, vector<96x128xf32>, vector<48x128xf32> -> vector<48x128xf32>
    %94 = arith.addf %89, %93 : vector<48x128xf32>
    %c4 = arith.constant 4 : index
    %c0_63 = arith.constant 0 : index
    %c0_64 = arith.constant 0 : index
    %95 = vector.load %arg7[%c4, %c0_63, %c0_64] : memref<8x1x128xf32, #tpu.memory_space<vmem>>, vector<1x1x128xf32>
    %96 = vector.shape_cast %95 : vector<1x1x128xf32> to vector<1x128xf32>
    %97 = vector.broadcast %96 : vector<1x128xf32> to vector<48x128xf32>
    %98 = arith.addf %94, %97 : vector<48x128xf32>
    %cst_65 = arith.constant 1.000000e+02 : f32
    %99 = vector.broadcast %cst_65 : f32 to vector<48x128xf32>
    %100 = arith.mulf %98, %99 : vector<48x128xf32>
    %cst_66 = arith.constant 2.000000e+01 : f32
    %101 = vector.broadcast %cst_66 : f32 to vector<48x128xf32>
    %102 = arith.minimumf %100, %101 : vector<48x128xf32>
    %cst_67 = arith.constant 2.000000e+01 : f32
    %103 = vector.broadcast %cst_67 : f32 to vector<48x128xf32>
    %104 = arith.cmpf ogt, %100, %103 : vector<48x128xf32>
    %105 = math.exp %102 : vector<48x128xf32>
    %106 = math.log1p %105 : vector<48x128xf32>
    %cst_68 = arith.constant 0.00999999977 : f32
    %107 = vector.broadcast %cst_68 : f32 to vector<48x128xf32>
    %108 = arith.mulf %106, %107 : vector<48x128xf32>
    %109 = arith.select %104, %98, %108 : vector<48x128xi1>, vector<48x128xf32>
    %110 = arith.truncf %109 : vector<48x128xf32> to vector<48x128xbf16>
    %c4_69 = arith.constant 4 : index
    %c0_70 = arith.constant 0 : index
    %c0_71 = arith.constant 0 : index
    %111 = vector.load %arg5[%c4_69, %c0_70, %c0_71] : memref<7x128x128xbf16, #tpu.memory_space<vmem>>, vector<1x128x128xbf16>
    %112 = vector.shape_cast %111 : vector<1x128x128xbf16> to vector<128x128xbf16>
    %cst_72 = arith.constant dense<0.000000e+00> : vector<48x128xf32>
    %113 = tpu.matmul %110, %112, %cst_72 {dimension_numbers = #tpu.dot_dimension_numbers<[1], [0], [0], [1], [0, 0, 1, 1], [], []>} : vector<48x128xbf16>, vector<128x128xbf16>, vector<48x128xf32> -> vector<48x128xf32>
    %c5 = arith.constant 5 : index
    %c0_73 = arith.constant 0 : index
    %c0_74 = arith.constant 0 : index
    %114 = vector.load %arg7[%c5, %c0_73, %c0_74] : memref<8x1x128xf32, #tpu.memory_space<vmem>>, vector<1x1x128xf32>
    %115 = vector.shape_cast %114 : vector<1x1x128xf32> to vector<1x128xf32>
    %116 = vector.broadcast %115 : vector<1x128xf32> to vector<48x128xf32>
    %117 = arith.addf %113, %116 : vector<48x128xf32>
    %cst_75 = arith.constant 1.000000e+02 : f32
    %118 = vector.broadcast %cst_75 : f32 to vector<48x128xf32>
    %119 = arith.mulf %117, %118 : vector<48x128xf32>
    %cst_76 = arith.constant 2.000000e+01 : f32
    %120 = vector.broadcast %cst_76 : f32 to vector<48x128xf32>
    %121 = arith.minimumf %119, %120 : vector<48x128xf32>
    %cst_77 = arith.constant 2.000000e+01 : f32
    %122 = vector.broadcast %cst_77 : f32 to vector<48x128xf32>
    %123 = arith.cmpf ogt, %119, %122 : vector<48x128xf32>
    %124 = math.exp %121 : vector<48x128xf32>
    %125 = math.log1p %124 : vector<48x128xf32>
    %cst_78 = arith.constant 0.00999999977 : f32
    %126 = vector.broadcast %cst_78 : f32 to vector<48x128xf32>
    %127 = arith.mulf %125, %126 : vector<48x128xf32>
    %128 = arith.select %123, %117, %127 : vector<48x128xi1>, vector<48x128xf32>
    %129 = arith.truncf %128 : vector<48x128xf32> to vector<48x128xbf16>
    %c5_79 = arith.constant 5 : index
    %c0_80 = arith.constant 0 : index
    %c0_81 = arith.constant 0 : index
    %130 = vector.load %arg5[%c5_79, %c0_80, %c0_81] : memref<7x128x128xbf16, #tpu.memory_space<vmem>>, vector<1x128x128xbf16>
    %131 = vector.shape_cast %130 : vector<1x128x128xbf16> to vector<128x128xbf16>
    %cst_82 = arith.constant dense<0.000000e+00> : vector<48x128xf32>
    %132 = tpu.matmul %129, %131, %cst_82 {dimension_numbers = #tpu.dot_dimension_numbers<[1], [0], [0], [1], [0, 0, 1, 1], [], []>} : vector<48x128xbf16>, vector<128x128xbf16>, vector<48x128xf32> -> vector<48x128xf32>
    %c6 = arith.constant 6 : index
    %c0_83 = arith.constant 0 : index
    %c0_84 = arith.constant 0 : index
    %133 = vector.load %arg7[%c6, %c0_83, %c0_84] : memref<8x1x128xf32, #tpu.memory_space<vmem>>, vector<1x1x128xf32>
    %134 = vector.shape_cast %133 : vector<1x1x128xf32> to vector<1x128xf32>
    %135 = vector.broadcast %134 : vector<1x128xf32> to vector<48x128xf32>
    %136 = arith.addf %132, %135 : vector<48x128xf32>
    %cst_85 = arith.constant 1.000000e+02 : f32
    %137 = vector.broadcast %cst_85 : f32 to vector<48x128xf32>
    %138 = arith.mulf %136, %137 : vector<48x128xf32>
    %cst_86 = arith.constant 2.000000e+01 : f32
    %139 = vector.broadcast %cst_86 : f32 to vector<48x128xf32>
    %140 = arith.minimumf %138, %139 : vector<48x128xf32>
    %cst_87 = arith.constant 2.000000e+01 : f32
    %141 = vector.broadcast %cst_87 : f32 to vector<48x128xf32>
    %142 = arith.cmpf ogt, %138, %141 : vector<48x128xf32>
    %143 = math.exp %140 : vector<48x128xf32>
    %144 = math.log1p %143 : vector<48x128xf32>
    %cst_88 = arith.constant 0.00999999977 : f32
    %145 = vector.broadcast %cst_88 : f32 to vector<48x128xf32>
    %146 = arith.mulf %144, %145 : vector<48x128xf32>
    %147 = arith.select %142, %136, %146 : vector<48x128xi1>, vector<48x128xf32>
    %148 = arith.truncf %147 : vector<48x128xf32> to vector<48x128xbf16>
    %c6_89 = arith.constant 6 : index
    %c0_90 = arith.constant 0 : index
    %c0_91 = arith.constant 0 : index
    %149 = vector.load %arg5[%c6_89, %c0_90, %c0_91] : memref<7x128x128xbf16, #tpu.memory_space<vmem>>, vector<1x128x128xbf16>
    %150 = vector.shape_cast %149 : vector<1x128x128xbf16> to vector<128x128xbf16>
    %cst_92 = arith.constant dense<0.000000e+00> : vector<48x128xf32>
    %151 = tpu.matmul %148, %150, %cst_92 {dimension_numbers = #tpu.dot_dimension_numbers<[1], [0], [0], [1], [0, 0, 1, 1], [], []>} : vector<48x128xbf16>, vector<128x128xbf16>, vector<48x128xf32> -> vector<48x128xf32>
    %c7 = arith.constant 7 : index
    %c0_93 = arith.constant 0 : index
    %c0_94 = arith.constant 0 : index
    %152 = vector.load %arg7[%c7, %c0_93, %c0_94] : memref<8x1x128xf32, #tpu.memory_space<vmem>>, vector<1x1x128xf32>
    %153 = vector.shape_cast %152 : vector<1x1x128xf32> to vector<1x128xf32>
    %154 = vector.broadcast %153 : vector<1x128xf32> to vector<48x128xf32>
    %155 = arith.addf %151, %154 : vector<48x128xf32>
    %cst_95 = arith.constant 1.000000e+02 : f32
    %156 = vector.broadcast %cst_95 : f32 to vector<48x128xf32>
    %157 = arith.mulf %155, %156 : vector<48x128xf32>
    %cst_96 = arith.constant 2.000000e+01 : f32
    %158 = vector.broadcast %cst_96 : f32 to vector<48x128xf32>
    %159 = arith.minimumf %157, %158 : vector<48x128xf32>
    %cst_97 = arith.constant 2.000000e+01 : f32
    %160 = vector.broadcast %cst_97 : f32 to vector<48x128xf32>
    %161 = arith.cmpf ogt, %157, %160 : vector<48x128xf32>
    %162 = math.exp %159 : vector<48x128xf32>
    %163 = math.log1p %162 : vector<48x128xf32>
    %cst_98 = arith.constant 0.00999999977 : f32
    %164 = vector.broadcast %cst_98 : f32 to vector<48x128xf32>
    %165 = arith.mulf %163, %164 : vector<48x128xf32>
    %166 = arith.select %161, %155, %165 : vector<48x128xi1>, vector<48x128xf32>
    %c0_99 = arith.constant 0 : index
    %c0_100 = arith.constant 0 : index
    %167 = vector.load %arg6[%c0_99, %c0_100] : memref<128x8xf32, #tpu.memory_space<vmem>>, vector<128x8xf32>
    %cst_101 = arith.constant dense<0.000000e+00> : vector<48x8xf32>
    %168 = tpu.matmul %166, %167, %cst_101 {dimension_numbers = #tpu.dot_dimension_numbers<[1], [0], [0], [1], [0, 0, 1, 1], [], []>} : vector<48x128xf32>, vector<128x8xf32>, vector<48x8xf32> -> vector<48x8xf32>
    %c0_102 = arith.constant 0 : index
    %c0_103 = arith.constant 0 : index
    %169 = vector.load %arg8[%c0_102, %c0_103] : memref<1x8xf32, #tpu.memory_space<vmem>>, vector<1x8xf32>
    %170 = vector.broadcast %169 : vector<1x8xf32> to vector<48x8xf32>
    %171 = arith.addf %168, %170 : vector<48x8xf32>
    %c0_104 = arith.constant 0 : index
    %c0_105 = arith.constant 0 : index
    %172 = vector.load %arg9[%c0_104, %c0_105] : memref<48x8xf32, #tpu.memory_space<vmem>>, vector<48x8xf32>
    tpu.vector_store %arg9[%c0_104, %c0_105], %171 {strides = array<i32>} : memref<48x8xf32, #tpu.memory_space<vmem>>, vector<48x8xf32>,
    return
  }
  func.func @transform_0(%arg0: i32) -> (i32, i32) {
    %c0_i32 = arith.constant 0 : i32
    %c0_i32_0 = arith.constant 0 : i32
    return %arg0, %c0_i32 : i32, i32
  }
  func.func @transform_1(%arg0: i32) -> (i32, i32) {
    %c0_i32 = arith.constant 0 : i32
    %c0_i32_0 = arith.constant 0 : i32
    return %arg0, %c0_i32 : i32, i32
  }
  func.func @transform_2(%arg0: i32) -> (i32, i32, i32) {
    %c0_i32 = arith.constant 0 : i32
    %c0_i32_0 = arith.constant 0 : i32
    %c0_i32_1 = arith.constant 0 : i32
    %c0_i32_2 = arith.constant 0 : i32
    return %c0_i32, %c0_i32_0, %c0_i32_1 : i32, i32, i32
  }
  func.func @transform_3(%arg0: i32) -> (i32, i32, i32) {
    %c0_i32 = arith.constant 0 : i32
    %c0_i32_0 = arith.constant 0 : i32
    %c0_i32_1 = arith.constant 0 : i32
    %c0_i32_2 = arith.constant 0 : i32
    return %c0_i32, %c0_i32_0, %c0_i32_1 : i32, i32, i32
  }
  func.func @transform_4(%arg0: i32) -> (i32, i32, i32) {
    %c0_i32 = arith.constant 0 : i32
    %c0_i32_0 = arith.constant 0 : i32
    %c0_i32_1 = arith.constant 0 : i32
    %c0_i32_2 = arith.constant 0 : i32
    return %c0_i32, %c0_i32_0, %c0_i32_1 : i32, i32, i32
  }
  func.func @transform_5(%arg0: i32) -> (i32, i32) {
    %c0_i32 = arith.constant 0 : i32
    %c0_i32_0 = arith.constant 0 : i32
    %c0_i32_1 = arith.constant 0 : i32
    return %c0_i32, %c0_i32_0 : i32, i32
  }
  func.func @transform_6(%arg0: i32) -> (i32, i32, i32) {
    %c0_i32 = arith.constant 0 : i32
    %c0_i32_0 = arith.constant 0 : i32
    %c0_i32_1 = arith.constant 0 : i32
    %c0_i32_2 = arith.constant 0 : i32
    return %c0_i32, %c0_i32_0, %c0_i32_1 : i32, i32, i32
  }
  func.func @transform_7(%arg0: i32) -> (i32, i32) {
    %c0_i32 = arith.constant 0 : i32
    %c0_i32_0 = arith.constant 0 : i32
    %c0_i32_1 = arith.constant 0 : i32
    return %c0_i32, %c0_i32_0 : i32, i32
  }
  func.func @transform_8(%arg0: i32) -> (i32, i32) {
    %c0_i32 = arith.constant 0 : i32
    %c0_i32_0 = arith.constant 0 : i32
    return %arg0, %c0_i32 : i32, i32
  }
}

</mosaic_0001>

<llo_original>
// kernel: deformation_network_forward.1
$region0: #{deformation_network_forward.1}
  #allocation0 [shape = 'u32[]', space=smem, size = 0x4, offset = 0x4, fixed_abs, tag = 'smem constant byte address 0x4 - core index']
  #allocation1 [shape = 'u32[72,128]{1,0:T(1,128)}', space=vmem, size = 0x9000, scoped, tag = 'internal scratch']
  %s0 = inlined_call_operand.vmem [shape: f32[336,6], index: 0, kind: input, shape index: {}]
  %s1 = inlined_call_operand.vmem [shape: f32[336,96], index: 1, kind: input, shape index: {}]
  %s2 = inlined_call_operand.vmem [shape: f32[2,6,128], index: 2, kind: input, shape index: {}]
  %s3 = inlined_call_operand.vmem [shape: f32[2,96,128], index: 3, kind: input, shape index: {}]
  %s4 = inlined_call_operand.vmem [shape: bf16[7,128,128], index: 4, kind: input, shape index: {}]
  %s5 = inlined_call_operand.vmem [shape: f32[128,8], index: 5, kind: input, shape index: {}]
  %s6 = inlined_call_operand.vmem [shape: f32[8,1,128], index: 6, kind: input, shape index: {}]
  %s7 = inlined_call_operand.vmem [shape: f32[1,8], index: 7, kind: input, shape index: {}]
  %s8 = inlined_call_operand.vmem [shape: f32[336,8], index: 8, kind: output, shape index: {}]
  %s9 = sld [smem:[#allocation0]]
  $region65: #{deformation_network_forward.1} parent=0
    _
  %s11 = ssub.s32 1, %s9
  %s12 = scalar_select 0, %s11, %s9
  loop: start=0, step=1, limit=9
  $region2: #{deformation_network_forward.1} parent=0 // loop_pre_header
    _
  $region3: #{deformation_network_forward.1} parent=0 // loop_header
    %s14 = sphi 0, %s18
    %p15 = scmp.ge.s32.totalorder %s14, 9
    %s24 = sphi 0, %s26
    %s27 = sphi 0, %s24
    %s28 = sphi 0, %s27
    %s44 = sphi 0, %s28
    %s50 = sphi 0, %s52
    %s53 = sphi 0, %s50
    %s54 = sphi 0, %s53
    %s70 = sphi 0, %s54
    %s74 = sphi 0, %s74
    %s76 = sphi 0, %s74
    %s77 = sphi 0, %s76
    %s91 = sphi 0, %s77
    %s95 = sphi 0, %s95
    %s97 = sphi 0, %s95
    %s98 = sphi 0, %s97
    %s112 = sphi 0, %s98
    %s116 = sphi 0, %s116
    %s118 = sphi 0, %s116
    %s119 = sphi 0, %s118
    %s133 = sphi 0, %s119
    %s137 = sphi 0, %s137
    %s139 = sphi 0, %s137
    %s140 = sphi 0, %s139
    %s154 = sphi 0, %s140
    %s158 = sphi 0, %s158
    %s160 = sphi 0, %s158
    %s161 = sphi 0, %s160
    %s175 = sphi 0, %s161
    %s179 = sphi 0, %s179
    %s181 = sphi 0, %s179
    %s182 = sphi 0, %s181
    %s196 = sphi 0, %s182
    %s202 = sphi 0, %s204
    %s205 = sphi 0, %s202
    %s206 = sphi 0, %s205
    %s222 = sphi 0, %s206
  $region4: #{deformation_network_forward.1} parent=0 // loop_header_branch
    %17 = sbr.rel (%p15) target = $region8
  $region5: #{deformation_network_forward.1} parent=0 // loop_body
    %s19 = ssub.s32 %s14, 1
    %s20 = ssub.s32 %s14, 2
    %s21 = sadd.s32 %s14, 1
    %s22 = ssub.s32 %s14, %s21
    %p23 = scmp.eq.s32.totalorder %s22, 0
    %s25 = sadd.s32 %s24, 1
    %s26 = scalar_select %p23, %s24, %s25
    %p29 = pneg %p23
    %p30 = scmp.eq.s32.totalorder %s14, 6
    %p31 = por %p29, %p30
    %p32 = scmp.ne.s32.totalorder %s24, %s27
    %p33 = scmp.eq.s32.totalorder %s14, 0
    %p34 = por %p32, %p33
    %p35 = scmp.ne.s32.totalorder %s24, %s27
    %p36 = scmp.eq.s32.totalorder %s19, 6
    %p37 = por %p35, %p36
    %p38 = scmp.ne.s32.totalorder %s27, %s28
    %p39 = scmp.eq.s32.totalorder %s19, 0
    %p40 = por %p38, %p39
    %p41 = scmp.ne.s32.totalorder %s27, %s28
    %p42 = scmp.eq.s32.totalorder %s20, 6
    %p43 = por %p41, %p42
    %p45 = scmp.ne.s32.totalorder %s28, %s44
    %p46 = scmp.eq.s32.totalorder %s20, 0
    %p47 = por %p45, %p46
    %s48 = ssub.s32 %s14, %s21
    %p49 = scmp.eq.s32.totalorder %s48, 0
    %s51 = sadd.s32 %s50, 1
    %s52 = scalar_select %p49, %s50, %s51
    %p55 = pneg %p49
    %p56 = scmp.eq.s32.totalorder %s14, 6
    %p57 = por %p55, %p56
    %p58 = scmp.ne.s32.totalorder %s50, %s53
    %p59 = scmp.eq.s32.totalorder %s14, 0
    %p60 = por %p58, %p59
    %p61 = scmp.ne.s32.totalorder %s50, %s53
    %p62 = scmp.eq.s32.totalorder %s19, 6
    %p63 = por %p61, %p62
    %p64 = scmp.ne.s32.totalorder %s53, %s54
    %p65 = scmp.eq.s32.totalorder %s19, 0
    %p66 = por %p64, %p65
    %p67 = scmp.ne.s32.totalorder %s53, %s54
    %p68 = scmp.eq.s32.totalorder %s20, 6
    %p69 = por %p67, %p68
    %p71 = scmp.ne.s32.totalorder %s54, %s70
    %p72 = scmp.eq.s32.totalorder %s20, 0
    %p73 = por %p71, %p72
    %s75 = sadd.s32 %s74, 1
    %p78 = scmp.eq.s32.totalorder %s14, 6
    %p79 = scmp.ne.s32.totalorder %s74, %s76
    %p80 = scmp.eq.s32.totalorder %s14, 0
    %p81 = por %p79, %p80
    %p82 = scmp.ne.s32.totalorder %s74, %s76
    %p83 = scmp.eq.s32.totalorder %s19, 6
    %p84 = por %p82, %p83
    %p85 = scmp.ne.s32.totalorder %s76, %s77
    %p86 = scmp.eq.s32.totalorder %s19, 0
    %p87 = por %p85, %p86
    %p88 = scmp.ne.s32.totalorder %s76, %s77
    %p89 = scmp.eq.s32.totalorder %s20, 6
    %p90 = por %p88, %p89
    %p92 = scmp.ne.s32.totalorder %s77, %s91
    %p93 = scmp.eq.s32.totalorder %s20, 0
    %p94 = por %p92, %p93
    %s96 = sadd.s32 %s95, 1
    %p99 = scmp.eq.s32.totalorder %s14, 6
    %p100 = scmp.ne.s32.totalorder %s95, %s97
    %p101 = scmp.eq.s32.totalorder %s14, 0
    %p102 = por %p100, %p101
    %p103 = scmp.ne.s32.totalorder %s95, %s97
    %p104 = scmp.eq.s32.totalorder %s19, 6
    %p105 = por %p103, %p104
    %p106 = scmp.ne.s32.totalorder %s97, %s98
    %p107 = scmp.eq.s32.totalorder %s19, 0
    %p108 = por %p106, %p107
    %p109 = scmp.ne.s32.totalorder %s97, %s98
    %p110 = scmp.eq.s32.totalorder %s20, 6
    %p111 = por %p109, %p110
    %p113 = scmp.ne.s32.totalorder %s98, %s112
    %p114 = scmp.eq.s32.totalorder %s20, 0
    %p115 = por %p113, %p114
    %s117 = sadd.s32 %s116, 1
    %p120 = scmp.eq.s32.totalorder %s14, 6
    %p121 = scmp.ne.s32.totalorder %s116, %s118
    %p122 = scmp.eq.s32.totalorder %s14, 0
    %p123 = por %p121, %p122
    %p124 = scmp.ne.s32.totalorder %s116, %s118
    %p125 = scmp.eq.s32.totalorder %s19, 6
    %p126 = por %p124, %p125
    %p127 = scmp.ne.s32.totalorder %s118, %s119
    %p128 = scmp.eq.s32.totalorder %s19, 0
    %p129 = por %p127, %p128
    %p130 = scmp.ne.s32.totalorder %s118, %s119
    %p131 = scmp.eq.s32.totalorder %s20, 6
    %p132 = por %p130, %p131
    %p134 = scmp.ne.s32.totalorder %s119, %s133
    %p135 = scmp.eq.s32.totalorder %s20, 0
    %p136 = por %p134, %p135
    %s138 = sadd.s32 %s137, 1
    %p141 = scmp.eq.s32.totalorder %s14, 6
    %p142 = scmp.ne.s32.totalorder %s137, %s139
    %p143 = scmp.eq.s32.totalorder %s14, 0
    %p144 = por %p142, %p143
    %p145 = scmp.ne.s32.totalorder %s137, %s139
    %p146 = scmp.eq.s32.totalorder %s19, 6
    %p147 = por %p145, %p146
    %p148 = scmp.ne.s32.totalorder %s139, %s140
    %p149 = scmp.eq.s32.totalorder %s19, 0
    %p150 = por %p148, %p149
    %p151 = scmp.ne.s32.totalorder %s139, %s140
    %p152 = scmp.eq.s32.totalorder %s20, 6
    %p153 = por %p151, %p152
    %p155 = scmp.ne.s32.totalorder %s140, %s154
    %p156 = scmp.eq.s32.totalorder %s20, 0
    %p157 = por %p155, %p156
    %s159 = sadd.s32 %s158, 1
    %p162 = scmp.eq.s32.totalorder %s14, 6
    %p163 = scmp.ne.s32.totalorder %s158, %s160
    %p164 = scmp.eq.s32.totalorder %s14, 0
    %p165 = por %p163, %p164
    %p166 = scmp.ne.s32.totalorder %s158, %s160
    %p167 = scmp.eq.s32.totalorder %s19, 6
    %p168 = por %p166, %p167
    %p169 = scmp.ne.s32.totalorder %s160, %s161
    %p170 = scmp.eq.s32.totalorder %s19, 0
    %p171 = por %p169, %p170
    %p172 = scmp.ne.s32.totalorder %s160, %s161
    %p173 = scmp.eq.s32.totalorder %s20, 6
    %p174 = por %p172, %p173
    %p176 = scmp.ne.s32.totalorder %s161, %s175
    %p177 = scmp.eq.s32.totalorder %s20, 0
    %p178 = por %p176, %p177
    %s180 = sadd.s32 %s179, 1
    %p183 = scmp.eq.s32.totalorder %s14, 6
    %p184 = scmp.ne.s32.totalorder %s179, %s181
    %p185 = scmp.eq.s32.totalorder %s14, 0
    %p186 = por %p184, %p185
    %p187 = scmp.ne.s32.totalorder %s179, %s181
    %p188 = scmp.eq.s32.totalorder %s19, 6
    %p189 = por %p187, %p188
    %p190 = scmp.ne.s32.totalorder %s181, %s182
    %p191 = scmp.eq.s32.totalorder %s19, 0
    %p192 = por %p190, %p191
    %p193 = scmp.ne.s32.totalorder %s181, %s182
    %p194 = scmp.eq.s32.totalorder %s20, 6
    %p195 = por %p193, %p194
    %p197 = scmp.ne.s32.totalorder %s182, %s196
    %p198 = scmp.eq.s32.totalorder %s20, 0
    %p199 = por %p197, %p198
    %s200 = ssub.s32 %s14, %s21
    %p201 = scmp.eq.s32.totalorder %s200, 0
    %s203 = sadd.s32 %s202, 1
    %s204 = scalar_select %p201, %s202, %s203
    %p207 = pneg %p201
    %p208 = scmp.eq.s32.totalorder %s14, 6
    %p209 = por %p207, %p208
    %p210 = scmp.ne.s32.totalorder %s202, %s205
    %p211 = scmp.eq.s32.totalorder %s14, 0
    %p212 = por %p210, %p211
    %p213 = scmp.ne.s32.totalorder %s202, %s205
    %p214 = scmp.eq.s32.totalorder %s19, 6
    %p215 = por %p213, %p214
    %p216 = scmp.ne.s32.totalorder %s205, %s206
    %p217 = scmp.eq.s32.totalorder %s19, 0
    %p218 = por %p216, %p217
    %p219 = scmp.ne.s32.totalorder %s205, %s206
    %p220 = scmp.eq.s32.totalorder %s20, 6
    %p221 = por %p219, %p220
    %p223 = scmp.ne.s32.totalorder %s206, %s222
    %p224 = scmp.eq.s32.totalorder %s20, 0
    %p225 = por %p223, %p224
    %p226 = scmp.le.s32.totalorder 1, %s14
    %p227 = scmp.lt.s32.totalorder %s14, 8
    %p228 = pnand %p226, %p227
    %p229 = pneg %p228
    // Predicated region
    $region9: #{deformation_network_forward.1} parent=5 // pred_check
      _
    $region10: #{deformation_network_forward.1} parent=5 // pred_check_branch
      %231 = sbr.rel (%p228) target = $region12
    $region11: #{deformation_network_forward.1} parent=5 // pred_region
      %s232 = ssub.s32 %s14, 1
      // Predicated region
      $region13: #{deformation_network_forward.1} parent=11 // pred_check
        %p233 = pneg %p87
      $region14: #{deformation_network_forward.1} parent=11 // pred_check_branch
        %235 = sbr.rel (%p233) target = $region16
      $region15: #{deformation_network_forward.1} parent=11 // pred_region
        _
      $region16: #{deformation_network_forward.1} parent=11 // pred_fallthru
        _
      // Predicated region
      $region17: #{deformation_network_forward.1} parent=11 // pred_check
        %p236 = pneg %p108
      $region18: #{deformation_network_forward.1} parent=11 // pred_check_branch
        %238 = sbr.rel (%p236) target = $region20
      $region19: #{deformation_network_forward.1} parent=11 // pred_region
        _
      $region20: #{deformation_network_forward.1} parent=11 // pred_fallthru
        _
      // Predicated region
      $region21: #{deformation_network_forward.1} parent=11 // pred_check
        %p239 = pneg %p129
      $region22: #{deformation_network_forward.1} parent=11 // pred_check_branch
        %241 = sbr.rel (%p239) target = $region24
      $region23: #{deformation_network_forward.1} parent=11 // pred_region
        _
      $region24: #{deformation_network_forward.1} parent=11 // pred_fallthru
        _
      // Predicated region
      $region25: #{deformation_network_forward.1} parent=11 // pred_check
        %p242 = pneg %p150
      $region26: #{deformation_network_forward.1} parent=11 // pred_check_branch
        %244 = sbr.rel (%p242) target = $region28
      $region27: #{deformation_network_forward.1} parent=11 // pred_region
        _
      $region28: #{deformation_network_forward.1} parent=11 // pred_fallthru
        _
      // Predicated region
      $region29: #{deformation_network_forward.1} parent=11 // pred_check
        %p245 = pneg %p171
      $region30: #{deformation_network_forward.1} parent=11 // pred_check_branch
        %247 = sbr.rel (%p245) target = $region32
      $region31: #{deformation_network_forward.1} parent=11 // pred_region
        _
      $region32: #{deformation_network_forward.1} parent=11 // pred_fallthru
        _
      // Predicated region
      $region33: #{deformation_network_forward.1} parent=11 // pred_check
        %p248 = pneg %p192
      $region34: #{deformation_network_forward.1} parent=11 // pred_check_branch
        %250 = sbr.rel (%p248) target = $region36
      $region35: #{deformation_network_forward.1} parent=11 // pred_region
        _
      $region36: #{deformation_network_forward.1} parent=11 // pred_fallthru
        _
    $region12: #{deformation_network_forward.1} parent=5 // pred_fallthru
      _
    %p251 = scmp.lt.s32.totalorder %s14, 7
    // Predicated region
    $region37: #{deformation_network_forward.1} parent=5 // pred_check
      %p252 = pneg %p251
    $region38: #{deformation_network_forward.1} parent=5 // pred_check_branch
      %254 = sbr.rel (%p252) target = $region40
    $region39: #{deformation_network_forward.1} parent=5 // pred_region
      // Predicated region
      $region41: #{deformation_network_forward.1} parent=39 // pred_check
        %p255 = pneg %p34
      $region42: #{deformation_network_forward.1} parent=39 // pred_check_branch
        %257 = sbr.rel (%p255) target = $region44
      $region43: #{deformation_network_forward.1} parent=39 // pred_region
        %s258 = smul.u32 6, %s14
        %p259 = scmp.lt.s32.totalorder %s258, 41
        %s260 = scalar_select %p259, %s258, 41
        %s261 = smul.addr %s260, 8
        %s262 = scalar_lea.vmem %s0, %s261
        %s263 = smul.u32 6, %s14
      $region44: #{deformation_network_forward.1} parent=39 // pred_fallthru
        _
      // Predicated region
      $region45: #{deformation_network_forward.1} parent=39 // pred_check
        %p264 = pneg %p60
      $region46: #{deformation_network_forward.1} parent=39 // pred_check_branch
        %266 = sbr.rel (%p264) target = $region48
      $region47: #{deformation_network_forward.1} parent=39 // pred_region
        %s267 = smul.u32 6, %s14
        %p268 = scmp.lt.s32.totalorder %s267, 41
        %s269 = scalar_select %p268, %s267, 41
        %s270 = smul.addr %s269, 8
        %s271 = scalar_lea.vmem %s1, %s270
        %s272 = smul.u32 6, %s14
      $region48: #{deformation_network_forward.1} parent=39 // pred_fallthru
        _
    $region40: #{deformation_network_forward.1} parent=5 // pred_fallthru
      _
    %p273 = scmp.le.s32.totalorder 1, %s14
    %p274 = scmp.lt.s32.totalorder %s14, 8
    %p275 = pnand %p273, %p274
    %p276 = pneg %p275
    // Predicated region
    $region49: #{deformation_network_forward.1} parent=5 // pred_check
      _
    $region50: #{deformation_network_forward.1} parent=5 // pred_check_branch
      %278 = sbr.rel (%p275) target = $region52
    $region51: #{deformation_network_forward.1} parent=5 // pred_region
      %s279 = ssub.s32 %s14, 1
      %s280 = smul.u32 6, %s19
      %p281 = scmp.lt.s32.totalorder %s280, 41
      %s282 = scalar_select %p281, %s280, 41
      %s283 = smul.addr %s282, 8
      %s284 = scalar_lea.vmem %s0, %s283
      %p285 = pneg %p40
      %p286 = pneg %p37
      %s287 = smul.u32 6, %s19
      %p288 = scmp.lt.s32.totalorder %s287, 41
      %s289 = scalar_select %p288, %s287, 41
      %s290 = smul.addr %s289, 8
      %s291 = scalar_lea.vmem %s1, %s290
      %p292 = pneg %p66
      %p293 = pneg %p63
      %p294 = pneg %p87
      %p295 = pneg %p84
      %p296 = pneg %p108
      %p297 = pneg %p105
      %p298 = pneg %p129
      %p299 = pneg %p126
      %p300 = pneg %p150
      %p301 = pneg %p147
      %p302 = pneg %p171
      %p303 = pneg %p168
      %p304 = pneg %p192
      %p305 = pneg %p189
      %p306 = pneg %p218
      %p307 = pneg %p215
      %s308 = smul.u32 6, %s19
      %p309 = scmp.lt.s32.totalorder %s308, 41
      %s310 = scalar_select %p309, %s308, 41
      %s311 = smul.addr %s310, 8
      %s312 = scalar_lea.vmem %s8, %s311
      %s313 = smul.u32 6, %s19
      %p314 = scmp.lt.s32.totalorder %s313, 41
      %s315 = scalar_select %p314, %s313, 41
      %s316 = smul.addr %s315, 8
      %s317 = scalar_lea.vmem %s0, %s316
      %s318 = smul.u32 6, %s19
      %s319 = smul.u32 6, %s19
      %p320 = scmp.lt.s32.totalorder %s319, 41
      %s321 = scalar_select %p320, %s319, 41
      %s322 = smul.addr %s321, 8
      %s323 = scalar_lea.vmem %s1, %s322
      %s324 = smul.u32 6, %s19
      %s325 = smul.u32 6, %s19
      %p326 = scmp.lt.s32.totalorder %s325, 41
      %s327 = scalar_select %p326, %s325, 41
      %s328 = smul.addr %s327, 8
      %s329 = scalar_lea.vmem %s8, %s328
      %s330 = smul.u32 6, %s19
      %v331 = vld [vmem:[%s317] sm:$0xff]
      %v332 = vld [vmem:[%s317 + $0x8] sm:$0xff]
      %v333 = vld [vmem:[%s317 + $0x10] sm:$0xff]
      %v334 = vld [vmem:[%s317 + $0x18] sm:$0xff]
      %v335 = vld [vmem:[%s317 + $0x20] sm:$0xff]
      %v336 = vld [vmem:[%s317 + $0x28] sm:$0xff]
      %v337 = vld [vmem:[%s2] sm:$0x3f]
      %v338 = vld [vmem:[%s323] sm:$0xff]
      %v339 = vld [vmem:[%s323 + $0x8] sm:$0xff]
      %v340 = vld [vmem:[%s323 + $0x10] sm:$0xff]
      %v341 = vld [vmem:[%s323 + $0x18] sm:$0xff]
      %v342 = vld [vmem:[%s323 + $0x20] sm:$0xff]
      %v343 = vld [vmem:[%s323 + $0x28] sm:$0xff]
      %v344 = vld [vmem:[%s3] sm:$0xff]
      %v345 = vld [vmem:[%s3 + $0x8] sm:$0xff]
      %v346 = vld [vmem:[%s3 + $0x10] sm:$0xff]
      %v347 = vld [vmem:[%s3 + $0x18] sm:$0xff]
      %v348 = vld [vmem:[%s3 + $0x20] sm:$0xff]
      %v349 = vld [vmem:[%s3 + $0x28] sm:$0xff]
      %v350 = vld [vmem:[%s3 + $0x30] sm:$0xff]
      %v351 = vld [vmem:[%s3 + $0x38] sm:$0xff]
      %v352 = vld [vmem:[%s3 + $0x40] sm:$0xff]
      %v353 = vld [vmem:[%s3 + $0x48] sm:$0xff]
      %v354 = vld [vmem:[%s3 + $0x50] sm:$0xff]
      %v355 = vld [vmem:[%s3 + $0x58] sm:$0xff]
      %vm356 = vcmask 785408
      %v358 = vsel %vm356, %v338, 0
      %v361 = vsel %vm356, %v339, 0
      %v364 = vsel %vm356, %v340, 0
      %v367 = vsel %vm356, %v341, 0
      %v370 = vsel %vm356, %v342, 0
      %v373 = vsel %vm356, %v343, 0
      %375 = vmatpush.msra.mxu0 0.0
      %376 = vmatpush.msra.mxu0 0.0
      %377 = vmatpush.msra.mxu0 0.0
      %378 = vmatpush.msra.mxu0 0.0
      %379 = vmatpush.msra.mxu0 %v355
      %380 = vmatpush.msra.mxu0 %v354
      %381 = vmatpush.msra.mxu0 %v353
      %382 = vmatpush.msra.mxu0 %v352
      %383 = vmatpush.msra.mxu0 %v351
      %384 = vmatpush.msra.mxu0 %v350
      %385 = vmatpush.msra.mxu0 %v349
      %386 = vmatpush.msra.mxu0 %v348
      %387 = vmatpush.msra.mxu0 %v347
      %388 = vmatpush.msra.mxu0 %v346
      %389 = vmatpush.msra.mxu0 %v345
      %390 = vmatpush.msra.mxu0 %v344
      %391 = vmatmul.f32.gmra.mxu0 %v358
      %v392 = vpop.f32.mrf.mxu0
      %v393 = vadd.f32 0.0, %v392
      %394 = vmatmul.f32.gmra.mxu0 %v361
      %v395 = vpop.f32.mrf.mxu0
      %v396 = vadd.f32 0.0, %v395
      %397 = vmatmul.f32.gmra.mxu0 %v364
      %v398 = vpop.f32.mrf.mxu0
      %v399 = vadd.f32 0.0, %v398
      %400 = vmatmul.f32.gmra.mxu0 %v367
      %v401 = vpop.f32.mrf.mxu0
      %v402 = vadd.f32 0.0, %v401
      %403 = vmatmul.f32.gmra.mxu0 %v370
      %v404 = vpop.f32.mrf.mxu0
      %v405 = vadd.f32 0.0, %v404
      %406 = vmatmul.f32.gmra.mxu0 %v373
      %v407 = vpop.f32.mrf.mxu0
      %v408 = vadd.f32 0.0, %v407
      %409 = vdwg.mxu0
      %vm410 = vcmask 48128
      %v412 = vsel %vm410, %v331, 0
      %v415 = vsel %vm410, %v332, 0
      %v418 = vsel %vm410, %v333, 0
      %v421 = vsel %vm410, %v334, 0
      %v424 = vsel %vm410, %v335, 0
      %v427 = vsel %vm410, %v336, 0
      %vm429 = vcmask 1045504
      %v431 = vsel %vm429, %v337, 0
      %433 = vmatpush.msra.mxu0 0.0
      %434 = vmatpush.msra.mxu0 0.0
      %435 = vmatpush.msra.mxu0 0.0
      %436 = vmatpush.msra.mxu0 0.0
      %437 = vmatpush.msra.mxu0 0.0
      %438 = vmatpush.msra.mxu0 0.0
      %439 = vmatpush.msra.mxu0 0.0
      %440 = vmatpush.msra.mxu0 0.0
      %441 = vmatpush.msra.mxu0 0.0
      %442 = vmatpush.msra.mxu0 0.0
      %443 = vmatpush.msra.mxu0 0.0
      %444 = vmatpush.msra.mxu0 0.0
      %445 = vmatpush.msra.mxu0 0.0
      %446 = vmatpush.msra.mxu0 0.0
      %447 = vmatpush.msra.mxu0 0.0
      %448 = vmatpush.msra.mxu0 %v431
      %449 = vmatmul.f32.gmra.mxu0 %v412
      %v450 = vpop.f32.mrf.mxu0
      %v451 = vadd.f32 %v393, %v450
      %452 = vmatmul.f32.gmra.mxu0 %v415
      %v453 = vpop.f32.mrf.mxu0
      %v454 = vadd.f32 %v396, %v453
      %455 = vmatmul.f32.gmra.mxu0 %v418
      %v456 = vpop.f32.mrf.mxu0
      %v457 = vadd.f32 %v399, %v456
      %458 = vmatmul.f32.gmra.mxu0 %v421
      %v459 = vpop.f32.mrf.mxu0
      %v460 = vadd.f32 %v402, %v459
      %461 = vmatmul.f32.gmra.mxu0 %v424
      %v462 = vpop.f32.mrf.mxu0
      %v463 = vadd.f32 %v405, %v462
      %464 = vmatmul.f32.gmra.mxu0 %v427
      %v465 = vpop.f32.mrf.mxu0
      %v466 = vadd.f32 %v408, %v465
      %467 = vdwg.mxu0
      %v468 = vld [vmem:[%s6] sm:$0x1]
      %v470 = vperm.slane %v468, 0
      %v472 = vadd.f32 %v451, %v470
      %v473 = vadd.f32 %v454, %v470
      %v474 = vadd.f32 %v457, %v470
      %v475 = vadd.f32 %v460, %v470
      %v476 = vadd.f32 %v463, %v470
      %v477 = vadd.f32 %v466, %v470
      %v478 = vmul.f32 %v472, 100.0
      %v479 = vmul.f32 %v473, 100.0
      %v480 = vmul.f32 %v474, 100.0
      %v481 = vmul.f32 %v475, 100.0
      %v482 = vmul.f32 %v476, 100.0
      %v483 = vmul.f32 %v477, 100.0
      %v484 = vmin.f32 %v478, 20.0
      %v485 = vmin.f32 %v479, 20.0
      %v486 = vmin.f32 %v480, 20.0
      %v487 = vmin.f32 %v481, 20.0
      %v488 = vmin.f32 %v482, 20.0
      %v489 = vmin.f32 %v483, 20.0
      %vm490 = vcmp.gt.f32.partialorder %v478, 20.0
      %vm491 = vcmp.gt.f32.partialorder %v479, 20.0
      %vm492 = vcmp.gt.f32.partialorder %v480, 20.0
      %vm493 = vcmp.gt.f32.partialorder %v481, 20.0
      %vm494 = vcmp.gt.f32.partialorder %v482, 20.0
      %vm495 = vcmp.gt.f32.partialorder %v483, 20.0
      %v496 = vmul.f32 %v484, 1.442695
      %v497 = vpow.pop %v496
      %v498 = vmul.f32 %v485, 1.442695
      %v499 = vpow.pop %v498
      %v500 = vmul.f32 %v486, 1.442695
      %v501 = vpow.pop %v500
      %v502 = vmul.f32 %v487, 1.442695
      %v503 = vpow.pop %v502
      %v504 = vmul.f32 %v488, 1.442695
      %v505 = vpow.pop %v504
      %v506 = vmul.f32 %v489, 1.442695
      %v507 = vpow.pop %v506
      %v508 = vadd.f32 %v497, 1.0
      %v509 = vlog2.pop %v508
      %v510 = vmul.f32 %v509, 0.6931472
      %v511 = vmul.f32 -0.5, %v497
      %v512 = vadd.f32 %v511, 1.0
      %v513 = vmul.f32 %v512, %v497
      %v514 = vand.u32 2147483647, %v497
      %vm515 = vcmp.lt.f32.partialorder %v514, 0.0004427343
      %v516 = vsel %vm515, %v513, %v510
      %v517 = vadd.f32 %v499, 1.0
      %v518 = vlog2.pop %v517
      %v519 = vmul.f32 %v518, 0.6931472
      %v520 = vmul.f32 -0.5, %v499
      %v521 = vadd.f32 %v520, 1.0
      %v522 = vmul.f32 %v521, %v499
      %v523 = vand.u32 2147483647, %v499
      %vm524 = vcmp.lt.f32.partialorder %v523, 0.0004427343
      %v525 = vsel %vm524, %v522, %v519
      %v526 = vadd.f32 %v501, 1.0
      %v527 = vlog2.pop %v526
      %v528 = vmul.f32 %v527, 0.6931472
      %v529 = vmul.f32 -0.5, %v501
      %v530 = vadd.f32 %v529, 1.0
      %v531 = vmul.f32 %v530, %v501
      %v532 = vand.u32 2147483647, %v501
      %vm533 = vcmp.lt.f32.partialorder %v532, 0.0004427343
      %v534 = vsel %vm533, %v531, %v528
      %v535 = vadd.f32 %v503, 1.0
      %v536 = vlog2.pop %v535
      %v537 = vmul.f32 %v536, 0.6931472
      %v538 = vmul.f32 -0.5, %v503
      %v539 = vadd.f32 %v538, 1.0
      %v540 = vmul.f32 %v539, %v503
      %v541 = vand.u32 2147483647, %v503
      %vm542 = vcmp.lt.f32.partialorder %v541, 0.0004427343
      %v543 = vsel %vm542, %v540, %v537
      %v544 = vadd.f32 %v505, 1.0
      %v545 = vlog2.pop %v544
      %v546 = vmul.f32 %v545, 0.6931472
      %v547 = vmul.f32 -0.5, %v505
      %v548 = vadd.f32 %v547, 1.0
      %v549 = vmul.f32 %v548, %v505
      %v550 = vand.u32 2147483647, %v505
      %vm551 = vcmp.lt.f32.partialorder %v550, 0.0004427343
      %v552 = vsel %vm551, %v549, %v546
      %v553 = vadd.f32 %v507, 1.0
      %v554 = vlog2.pop %v553
      %v555 = vmul.f32 %v554, 0.6931472
      %v556 = vmul.f32 -0.5, %v507
      %v557 = vadd.f32 %v556, 1.0
      %v558 = vmul.f32 %v557, %v507
      %v559 = vand.u32 2147483647, %v507
      %vm560 = vcmp.lt.f32.partialorder %v559, 0.0004427343
      %v561 = vsel %vm560, %v558, %v555
      %v562 = vmul.f32 %v516, 0.01
      %v563 = vmul.f32 %v525, 0.01
      %v564 = vmul.f32 %v534, 0.01
      %v565 = vmul.f32 %v543, 0.01
      %v566 = vmul.f32 %v552, 0.01
      %v567 = vmul.f32 %v561, 0.01
      %v568 = vsel %vm490, %v472, %v562
      %v569 = vsel %vm491, %v473, %v563
      %v570 = vsel %vm492, %v474, %v564
      %v571 = vsel %vm493, %v475, %v565
      %v572 = vsel %vm494, %v476, %v566
      %v573 = vsel %vm495, %v477, %v567
      %v574 = vpack.c.bf16 %v569, %v568
      %v575 = vpack.c.bf16 %v571, %v570
      %v576 = vpack.c.bf16 %v573, %v572
      %v577 = vld [vmem:[%s4] sm:$0xf]
      %v578 = vld [vmem:[%s4 + $0x4] sm:$0xf]
      %v579 = vld [vmem:[%s4 + $0x8] sm:$0xf]
      %v580 = vld [vmem:[%s4 + $0xc] sm:$0xf]
      %v581 = vld [vmem:[%s4 + $0x10] sm:$0xf]
      %v582 = vld [vmem:[%s4 + $0x14] sm:$0xf]
      %v583 = vld [vmem:[%s4 + $0x18] sm:$0xf]
      %v584 = vld [vmem:[%s4 + $0x1c] sm:$0xf]
      %v585 = vld [vmem:[%s4 + $0x20] sm:$0xf]
      %v586 = vld [vmem:[%s4 + $0x24] sm:$0xf]
      %v587 = vld [vmem:[%s4 + $0x28] sm:$0xf]
      %v588 = vld [vmem:[%s4 + $0x2c] sm:$0xf]
      %v589 = vld [vmem:[%s4 + $0x30] sm:$0xf]
      %v590 = vld [vmem:[%s4 + $0x34] sm:$0xf]
      %v591 = vld [vmem:[%s4 + $0x38] sm:$0xf]
      %v592 = vld [vmem:[%s4 + $0x3c] sm:$0xf]
      %s593 = scalar_lea.vmem %s6, 1
      %v594 = vld [vmem:[%s593] sm:$0x1]
      %v596 = vperm.slane %v594, 0
      %v614 = vunpack.c.l.b16 %v577
      %v615 = vunpack.c.l.b16 %v578
      %v616 = vunpack.c.l.b16 %v579
      %v617 = vunpack.c.l.b16 %v580
      %v618 = vunpack.c.l.b16 %v581
      %v619 = vunpack.c.l.b16 %v582
      %v620 = vunpack.c.l.b16 %v583
      %v621 = vunpack.c.l.b16 %v584
      %v622 = vunpack.c.l.b16 %v585
      %v623 = vunpack.c.l.b16 %v586
      %v624 = vunpack.c.l.b16 %v587
      %v625 = vunpack.c.l.b16 %v588
      %v626 = vunpack.c.l.b16 %v589
      %v627 = vunpack.c.l.b16 %v590
      %v628 = vunpack.c.l.b16 %v591
      %v629 = vunpack.c.l.b16 %v592
      %v630 = vpack.c.b16 %v615, %v614
      %v631 = vpack.c.b16 %v617, %v616
      %v632 = vpack.c.b16 %v619, %v618
      %v633 = vpack.c.b16 %v621, %v620
      %v634 = vpack.c.b16 %v623, %v622
      %v635 = vpack.c.b16 %v625, %v624
      %v636 = vpack.c.b16 %v627, %v626
      %v637 = vpack.c.b16 %v629, %v628
      %646 = vmatpush.bf16.msra.mxu0 %v637
      %647 = vmatpush.bf16.msra.mxu0 %v636
      %648 = vmatpush.bf16.msra.mxu0 %v635
      %649 = vmatpush.bf16.msra.mxu0 %v634
      %650 = vmatpush.bf16.msra.mxu0 %v633
      %651 = vmatpush.bf16.msra.mxu0 %v632
      %652 = vmatpush.bf16.msra.mxu0 %v631
      %653 = vmatpush.bf16.msra.mxu0 %v630
      %654 = vmatmul.bf16.gmra.mxu0 %v574
      %v655 = vpop.f32.mrf.mxu0
      %v656 = vadd.f32 %v596, %v655
      %v657 = vpop.f32.mrf.mxu0
      %v658 = vadd.f32 %v596, %v657
      %659 = vmatmul.bf16.gmra.mxu0 %v575
      %v660 = vpop.f32.mrf.mxu0
      %v661 = vadd.f32 %v596, %v660
      %v662 = vpop.f32.mrf.mxu0
      %v663 = vadd.f32 %v596, %v662
      %664 = vmatmul.bf16.gmra.mxu0 %v576
      %v665 = vpop.f32.mrf.mxu0
      %v666 = vadd.f32 %v596, %v665
      %v667 = vpop.f32.mrf.mxu0
      %v668 = vadd.f32 %v596, %v667
      %669 = vdwg.mxu0
      %v670 = vmul.f32 %v656, 100.0
      %v671 = vmul.f32 %v658, 100.0
      %v672 = vmul.f32 %v661, 100.0
      %v673 = vmul.f32 %v663, 100.0
      %v674 = vmul.f32 %v666, 100.0
      %v675 = vmul.f32 %v668, 100.0
      %v676 = vmin.f32 %v670, 20.0
      %v677 = vmin.f32 %v671, 20.0
      %v678 = vmin.f32 %v672, 20.0
      %v679 = vmin.f32 %v673, 20.0
      %v680 = vmin.f32 %v674, 20.0
      %v681 = vmin.f32 %v675, 20.0
      %vm682 = vcmp.gt.f32.partialorder %v670, 20.0
      %vm683 = vcmp.gt.f32.partialorder %v671, 20.0
      %vm684 = vcmp.gt.f32.partialorder %v672, 20.0
      %vm685 = vcmp.gt.f32.partialorder %v673, 20.0
      %vm686 = vcmp.gt.f32.partialorder %v674, 20.0
      %vm687 = vcmp.gt.f32.partialorder %v675, 20.0
      %v688 = vmul.f32 %v676, 1.442695
      %v689 = vpow.pop %v688
      %v690 = vmul.f32 %v677, 1.442695
      %v691 = vpow.pop %v690
      %v692 = vmul.f32 %v678, 1.442695
      %v693 = vpow.pop %v692
      %v694 = vmul.f32 %v679, 1.442695
      %v695 = vpow.pop %v694
      %v696 = vmul.f32 %v680, 1.442695
      %v697 = vpow.pop %v696
      %v698 = vmul.f32 %v681, 1.442695
      %v699 = vpow.pop %v698
      %v700 = vadd.f32 %v689, 1.0
      %v701 = vlog2.pop %v700
      %v702 = vmul.f32 %v701, 0.6931472
      %v703 = vmul.f32 -0.5, %v689
      %v704 = vadd.f32 %v703, 1.0
      %v705 = vmul.f32 %v704, %v689
      %v706 = vand.u32 2147483647, %v689
      %vm707 = vcmp.lt.f32.partialorder %v706, 0.0004427343
      %v708 = vsel %vm707, %v705, %v702
      %v709 = vadd.f32 %v691, 1.0
      %v710 = vlog2.pop %v709
      %v711 = vmul.f32 %v710, 0.6931472
      %v712 = vmul.f32 -0.5, %v691
      %v713 = vadd.f32 %v712, 1.0
      %v714 = vmul.f32 %v713, %v691
      %v715 = vand.u32 2147483647, %v691
      %vm716 = vcmp.lt.f32.partialorder %v715, 0.0004427343
      %v717 = vsel %vm716, %v714, %v711
      %v718 = vadd.f32 %v693, 1.0
      %v719 = vlog2.pop %v718
      %v720 = vmul.f32 %v719, 0.6931472
      %v721 = vmul.f32 -0.5, %v693
      %v722 = vadd.f32 %v721, 1.0
      %v723 = vmul.f32 %v722, %v693
      %v724 = vand.u32 2147483647, %v693
      %vm725 = vcmp.lt.f32.partialorder %v724, 0.0004427343
      %v726 = vsel %vm725, %v723, %v720
      %v727 = vadd.f32 %v695, 1.0
      %v728 = vlog2.pop %v727
      %v729 = vmul.f32 %v728, 0.6931472
      %v730 = vmul.f32 -0.5, %v695
      %v731 = vadd.f32 %v730, 1.0
      %v732 = vmul.f32 %v731, %v695
      %v733 = vand.u32 2147483647, %v695
      %vm734 = vcmp.lt.f32.partialorder %v733, 0.0004427343
      %v735 = vsel %vm734, %v732, %v729
      %v736 = vadd.f32 %v697, 1.0
      %v737 = vlog2.pop %v736
      %v738 = vmul.f32 %v737, 0.6931472
      %v739 = vmul.f32 -0.5, %v697
      %v740 = vadd.f32 %v739, 1.0
      %v741 = vmul.f32 %v740, %v697
      %v742 = vand.u32 2147483647, %v697
      %vm743 = vcmp.lt.f32.partialorder %v742, 0.0004427343
      %v744 = vsel %vm743, %v741, %v738
      %v745 = vadd.f32 %v699, 1.0
      %v746 = vlog2.pop %v745
      %v747 = vmul.f32 %v746, 0.6931472
      %v748 = vmul.f32 -0.5, %v699
      %v749 = vadd.f32 %v748, 1.0
      %v750 = vmul.f32 %v749, %v699
      %v751 = vand.u32 2147483647, %v699
      %vm752 = vcmp.lt.f32.partialorder %v751, 0.0004427343
      %v753 = vsel %vm752, %v750, %v747
      %v754 = vmul.f32 %v708, 0.01
      %v755 = vmul.f32 %v717, 0.01
      %v756 = vmul.f32 %v726, 0.01
      %v757 = vmul.f32 %v735, 0.01
      %v758 = vmul.f32 %v744, 0.01
      %v759 = vmul.f32 %v753, 0.01
      %v760 = vsel %vm682, %v656, %v754
      %v761 = vsel %vm683, %v658, %v755
      %v762 = vsel %vm684, %v661, %v756
      %v763 = vsel %vm685, %v663, %v757
      %v764 = vsel %vm686, %v666, %v758
      %v765 = vsel %vm687, %v668, %v759
      %v766 = vpack.c.bf16 %v761, %v760
      %v767 = vpack.c.bf16 %v763, %v762
      %v768 = vpack.c.bf16 %v765, %v764
      %s769 = scalar_lea.vmem %s4, 64
      %v770 = vld [vmem:[%s769] sm:$0xf]
      %v771 = vld [vmem:[%s769 + $0x4] sm:$0xf]
      %v772 = vld [vmem:[%s769 + $0x8] sm:$0xf]
      %v773 = vld [vmem:[%s769 + $0xc] sm:$0xf]
      %v774 = vld [vmem:[%s769 + $0x10] sm:$0xf]
      %v775 = vld [vmem:[%s769 + $0x14] sm:$0xf]
      %v776 = vld [vmem:[%s769 + $0x18] sm:$0xf]
      %v777 = vld [vmem:[%s769 + $0x1c] sm:$0xf]
      %v778 = vld [vmem:[%s769 + $0x20] sm:$0xf]
      %v779 = vld [vmem:[%s769 + $0x24] sm:$0xf]
      %v780 = vld [vmem:[%s769 + $0x28] sm:$0xf]
      %v781 = vld [vmem:[%s769 + $0x2c] sm:$0xf]
      %v782 = vld [vmem:[%s769 + $0x30] sm:$0xf]
      %v783 = vld [vmem:[%s769 + $0x34] sm:$0xf]
      %v784 = vld [vmem:[%s769 + $0x38] sm:$0xf]
      %v785 = vld [vmem:[%s769 + $0x3c] sm:$0xf]
      %s786 = scalar_lea.vmem %s6, 2
      %v787 = vld [vmem:[%s786] sm:$0x1]
      %v789 = vperm.slane %v787, 0
      %v807 = vunpack.c.l.b16 %v770
      %v808 = vunpack.c.l.b16 %v771
      %v809 = vunpack.c.l.b16 %v772
      %v810 = vunpack.c.l.b16 %v773
      %v811 = vunpack.c.l.b16 %v774
      %v812 = vunpack.c.l.b16 %v775
      %v813 = vunpack.c.l.b16 %v776
      %v814 = vunpack.c.l.b16 %v777
      %v815 = vunpack.c.l.b16 %v778
      %v816 = vunpack.c.l.b16 %v779
      %v817 = vunpack.c.l.b16 %v780
      %v818 = vunpack.c.l.b16 %v781
      %v819 = vunpack.c.l.b16 %v782
      %v820 = vunpack.c.l.b16 %v783
      %v821 = vunpack.c.l.b16 %v784
      %v822 = vunpack.c.l.b16 %v785
      %v823 = vpack.c.b16 %v808, %v807
      %v824 = vpack.c.b16 %v810, %v809
      %v825 = vpack.c.b16 %v812, %v811
      %v826 = vpack.c.b16 %v814, %v813
      %v827 = vpack.c.b16 %v816, %v815
      %v828 = vpack.c.b16 %v818, %v817
      %v829 = vpack.c.b16 %v820, %v819
      %v830 = vpack.c.b16 %v822, %v821
      %839 = vmatpush.bf16.msra.mxu0 %v830
      %840 = vmatpush.bf16.msra.mxu0 %v829
      %841 = vmatpush.bf16.msra.mxu0 %v828
      %842 = vmatpush.bf16.msra.mxu0 %v827
      %843 = vmatpush.bf16.msra.mxu0 %v826
      %844 = vmatpush.bf16.msra.mxu0 %v825
      %845 = vmatpush.bf16.msra.mxu0 %v824
      %846 = vmatpush.bf16.msra.mxu0 %v823
      %847 = vmatmul.bf16.gmra.mxu0 %v766
      %v848 = vpop.f32.mrf.mxu0
      %v849 = vadd.f32 %v789, %v848
      %v850 = vpop.f32.mrf.mxu0
      %v851 = vadd.f32 %v789, %v850
      %852 = vmatmul.bf16.gmra.mxu0 %v767
      %v853 = vpop.f32.mrf.mxu0
      %v854 = vadd.f32 %v789, %v853
      %v855 = vpop.f32.mrf.mxu0
      %v856 = vadd.f32 %v789, %v855
      %857 = vmatmul.bf16.gmra.mxu0 %v768
      %v858 = vpop.f32.mrf.mxu0
      %v859 = vadd.f32 %v789, %v858
      %v860 = vpop.f32.mrf.mxu0
      %v861 = vadd.f32 %v789, %v860
      %862 = vdwg.mxu0
      %v863 = vmul.f32 %v849, 100.0
      %v864 = vmul.f32 %v851, 100.0
      %v865 = vmul.f32 %v854, 100.0
      %v866 = vmul.f32 %v856, 100.0
      %v867 = vmul.f32 %v859, 100.0
      %v868 = vmul.f32 %v861, 100.0
      %v869 = vmin.f32 %v863, 20.0
      %v870 = vmin.f32 %v864, 20.0
      %v871 = vmin.f32 %v865, 20.0
      %v872 = vmin.f32 %v866, 20.0
      %v873 = vmin.f32 %v867, 20.0
      %v874 = vmin.f32 %v868, 20.0
      %vm875 = vcmp.gt.f32.partialorder %v863, 20.0
      %vm876 = vcmp.gt.f32.partialorder %v864, 20.0
      %vm877 = vcmp.gt.f32.partialorder %v865, 20.0
      %vm878 = vcmp.gt.f32.partialorder %v866, 20.0
      %vm879 = vcmp.gt.f32.partialorder %v867, 20.0
      %vm880 = vcmp.gt.f32.partialorder %v868, 20.0
      %v881 = vmul.f32 %v869, 1.442695
      %v882 = vpow.pop %v881
      %v883 = vmul.f32 %v870, 1.442695
      %v884 = vpow.pop %v883
      %v885 = vmul.f32 %v871, 1.442695
      %v886 = vpow.pop %v885
      %v887 = vmul.f32 %v872, 1.442695
      %v888 = vpow.pop %v887
      %v889 = vmul.f32 %v873, 1.442695
      %v890 = vpow.pop %v889
      %v891 = vmul.f32 %v874, 1.442695
      %v892 = vpow.pop %v891
      %v893 = vadd.f32 %v882, 1.0
      %v894 = vlog2.pop %v893
      %v895 = vmul.f32 %v894, 0.6931472
      %v896 = vmul.f32 -0.5, %v882
      %v897 = vadd.f32 %v896, 1.0
      %v898 = vmul.f32 %v897, %v882
      %v899 = vand.u32 2147483647, %v882
      %vm900 = vcmp.lt.f32.partialorder %v899, 0.0004427343
      %v901 = vsel %vm900, %v898, %v895
      %v902 = vadd.f32 %v884, 1.0
      %v903 = vlog2.pop %v902
      %v904 = vmul.f32 %v903, 0.6931472
      %v905 = vmul.f32 -0.5, %v884
      %v906 = vadd.f32 %v905, 1.0
      %v907 = vmul.f32 %v906, %v884
      %v908 = vand.u32 2147483647, %v884
      %vm909 = vcmp.lt.f32.partialorder %v908, 0.0004427343
      %v910 = vsel %vm909, %v907, %v904
      %v911 = vadd.f32 %v886, 1.0
      %v912 = vlog2.pop %v911
      %v913 = vmul.f32 %v912, 0.6931472
      %v914 = vmul.f32 -0.5, %v886
      %v915 = vadd.f32 %v914, 1.0
      %v916 = vmul.f32 %v915, %v886
      %v917 = vand.u32 2147483647, %v886
      %vm918 = vcmp.lt.f32.partialorder %v917, 0.0004427343
      %v919 = vsel %vm918, %v916, %v913
      %v920 = vadd.f32 %v888, 1.0
      %v921 = vlog2.pop %v920
      %v922 = vmul.f32 %v921, 0.6931472
      %v923 = vmul.f32 -0.5, %v888
      %v924 = vadd.f32 %v923, 1.0
      %v925 = vmul.f32 %v924, %v888
      %v926 = vand.u32 2147483647, %v888
      %vm927 = vcmp.lt.f32.partialorder %v926, 0.0004427343
      %v928 = vsel %vm927, %v925, %v922
      %v929 = vadd.f32 %v890, 1.0
      %v930 = vlog2.pop %v929
      %v931 = vmul.f32 %v930, 0.6931472
      %v932 = vmul.f32 -0.5, %v890
      %v933 = vadd.f32 %v932, 1.0
      %v934 = vmul.f32 %v933, %v890
      %v935 = vand.u32 2147483647, %v890
      %vm936 = vcmp.lt.f32.partialorder %v935, 0.0004427343
      %v937 = vsel %vm936, %v934, %v931
      %v938 = vadd.f32 %v892, 1.0
      %v939 = vlog2.pop %v938
      %v940 = vmul.f32 %v939, 0.6931472
      %v941 = vmul.f32 -0.5, %v892
      %v942 = vadd.f32 %v941, 1.0
      %v943 = vmul.f32 %v942, %v892
      %v944 = vand.u32 2147483647, %v892
      %vm945 = vcmp.lt.f32.partialorder %v944, 0.0004427343
      %v946 = vsel %vm945, %v943, %v940
      %v947 = vmul.f32 %v901, 0.01
      %v948 = vmul.f32 %v910, 0.01
      %v949 = vmul.f32 %v919, 0.01
      %v950 = vmul.f32 %v928, 0.01
      %v951 = vmul.f32 %v937, 0.01
      %v952 = vmul.f32 %v946, 0.01
      %v953 = vsel %vm875, %v849, %v947
      %v954 = vsel %vm876, %v851, %v948
      %v955 = vsel %vm877, %v854, %v949
      %v956 = vsel %vm878, %v856, %v950
      %v957 = vsel %vm879, %v859, %v951
      %v958 = vsel %vm880, %v861, %v952
      %v959 = vpack.c.bf16 %v954, %v953
      %v960 = vpack.c.bf16 %v956, %v955
      %v961 = vpack.c.bf16 %v958, %v957
      %s962 = scalar_lea.vmem %s4, 128
      %v963 = vld [vmem:[%s962] sm:$0xf]
      %v964 = vld [vmem:[%s962 + $0x4] sm:$0xf]
      %v965 = vld [vmem:[%s962 + $0x8] sm:$0xf]
      %v966 = vld [vmem:[%s962 + $0xc] sm:$0xf]
      %v967 = vld [vmem:[%s962 + $0x10] sm:$0xf]
      %v968 = vld [vmem:[%s962 + $0x14] sm:$0xf]
      %v969 = vld [vmem:[%s962 + $0x18] sm:$0xf]
      %v970 = vld [vmem:[%s962 + $0x1c] sm:$0xf]
      %v971 = vld [vmem:[%s962 + $0x20] sm:$0xf]
      %v972 = vld [vmem:[%s962 + $0x24] sm:$0xf]
      %v973 = vld [vmem:[%s962 + $0x28] sm:$0xf]
      %v974 = vld [vmem:[%s962 + $0x2c] sm:$0xf]
      %v975 = vld [vmem:[%s962 + $0x30] sm:$0xf]
      %v976 = vld [vmem:[%s962 + $0x34] sm:$0xf]
      %v977 = vld [vmem:[%s962 + $0x38] sm:$0xf]
      %v978 = vld [vmem:[%s962 + $0x3c] sm:$0xf]
      %s979 = scalar_lea.vmem %s6, 3
      %v980 = vld [vmem:[%s979] sm:$0x1]
      %v982 = vperm.slane %v980, 0
      %v1000 = vunpack.c.l.b16 %v963
      %v1001 = vunpack.c.l.b16 %v964
      %v1002 = vunpack.c.l.b16 %v965
      %v1003 = vunpack.c.l.b16 %v966
      %v1004 = vunpack.c.l.b16 %v967
      %v1005 = vunpack.c.l.b16 %v968
      %v1006 = vunpack.c.l.b16 %v969
      %v1007 = vunpack.c.l.b16 %v970
      %v1008 = vunpack.c.l.b16 %v971
      %v1009 = vunpack.c.l.b16 %v972
      %v1010 = vunpack.c.l.b16 %v973
      %v1011 = vunpack.c.l.b16 %v974
      %v1012 = vunpack.c.l.b16 %v975
      %v1013 = vunpack.c.l.b16 %v976
      %v1014 = vunpack.c.l.b16 %v977
      %v1015 = vunpack.c.l.b16 %v978
      %v1016 = vpack.c.b16 %v1001, %v1000
      %v1017 = vpack.c.b16 %v1003, %v1002
      %v1018 = vpack.c.b16 %v1005, %v1004
      %v1019 = vpack.c.b16 %v1007, %v1006
      %v1020 = vpack.c.b16 %v1009, %v1008
      %v1021 = vpack.c.b16 %v1011, %v1010
      %v1022 = vpack.c.b16 %v1013, %v1012
      %v1023 = vpack.c.b16 %v1015, %v1014
      %1032 = vmatpush.bf16.msra.mxu0 %v1023
      %1033 = vmatpush.bf16.msra.mxu0 %v1022
      %1034 = vmatpush.bf16.msra.mxu0 %v1021
      %1035 = vmatpush.bf16.msra.mxu0 %v1020
      %1036 = vmatpush.bf16.msra.mxu0 %v1019
      %1037 = vmatpush.bf16.msra.mxu0 %v1018
      %1038 = vmatpush.bf16.msra.mxu0 %v1017
      %1039 = vmatpush.bf16.msra.mxu0 %v1016
      %1040 = vmatmul.bf16.gmra.mxu0 %v959
      %v1041 = vpop.f32.mrf.mxu0
      %v1042 = vadd.f32 %v982, %v1041
      %v1043 = vpop.f32.mrf.mxu0
      %v1044 = vadd.f32 %v982, %v1043
      %1045 = vmatmul.bf16.gmra.mxu0 %v960
      %v1046 = vpop.f32.mrf.mxu0
      %v1047 = vadd.f32 %v982, %v1046
      %v1048 = vpop.f32.mrf.mxu0
      %v1049 = vadd.f32 %v982, %v1048
      %1050 = vmatmul.bf16.gmra.mxu0 %v961
      %v1051 = vpop.f32.mrf.mxu0
      %v1052 = vadd.f32 %v982, %v1051
      %v1053 = vpop.f32.mrf.mxu0
      %v1054 = vadd.f32 %v982, %v1053
      %1055 = vdwg.mxu0
      %v1056 = vmul.f32 %v1042, 100.0
      %v1057 = vmul.f32 %v1044, 100.0
      %v1058 = vmul.f32 %v1047, 100.0
      %v1059 = vmul.f32 %v1049, 100.0
      %v1060 = vmul.f32 %v1052, 100.0
      %v1061 = vmul.f32 %v1054, 100.0
      %v1062 = vmin.f32 %v1056, 20.0
      %v1063 = vmin.f32 %v1057, 20.0
      %v1064 = vmin.f32 %v1058, 20.0
      %v1065 = vmin.f32 %v1059, 20.0
      %v1066 = vmin.f32 %v1060, 20.0
      %v1067 = vmin.f32 %v1061, 20.0
      %vm1068 = vcmp.gt.f32.partialorder %v1056, 20.0
      %vm1069 = vcmp.gt.f32.partialorder %v1057, 20.0
      %vm1070 = vcmp.gt.f32.partialorder %v1058, 20.0
      %vm1071 = vcmp.gt.f32.partialorder %v1059, 20.0
      %vm1072 = vcmp.gt.f32.partialorder %v1060, 20.0
      %vm1073 = vcmp.gt.f32.partialorder %v1061, 20.0
      %v1074 = vmul.f32 %v1062, 1.442695
      %v1075 = vpow.pop %v1074
      %v1076 = vmul.f32 %v1063, 1.442695
      %v1077 = vpow.pop %v1076
      %v1078 = vmul.f32 %v1064, 1.442695
      %v1079 = vpow.pop %v1078
      %v1080 = vmul.f32 %v1065, 1.442695
      %v1081 = vpow.pop %v1080
      %v1082 = vmul.f32 %v1066, 1.442695
      %v1083 = vpow.pop %v1082
      %v1084 = vmul.f32 %v1067, 1.442695
      %v1085 = vpow.pop %v1084
      %v1086 = vadd.f32 %v1075, 1.0
      %v1087 = vlog2.pop %v1086
      %v1088 = vmul.f32 %v1087, 0.6931472
      %v1089 = vmul.f32 -0.5, %v1075
      %v1090 = vadd.f32 %v1089, 1.0
      %v1091 = vmul.f32 %v1090, %v1075
      %v1092 = vand.u32 2147483647, %v1075
      %vm1093 = vcmp.lt.f32.partialorder %v1092, 0.0004427343
      %v1094 = vsel %vm1093, %v1091, %v1088
      %v1095 = vadd.f32 %v1077, 1.0
      %v1096 = vlog2.pop %v1095
      %v1097 = vmul.f32 %v1096, 0.6931472
      %v1098 = vmul.f32 -0.5, %v1077
      %v1099 = vadd.f32 %v1098, 1.0
      %v1100 = vmul.f32 %v1099, %v1077
      %v1101 = vand.u32 2147483647, %v1077
      %vm1102 = vcmp.lt.f32.partialorder %v1101, 0.0004427343
      %v1103 = vsel %vm1102, %v1100, %v1097
      %v1104 = vadd.f32 %v1079, 1.0
      %v1105 = vlog2.pop %v1104
      %v1106 = vmul.f32 %v1105, 0.6931472
      %v1107 = vmul.f32 -0.5, %v1079
      %v1108 = vadd.f32 %v1107, 1.0
      %v1109 = vmul.f32 %v1108, %v1079
      %v1110 = vand.u32 2147483647, %v1079
      %vm1111 = vcmp.lt.f32.partialorder %v1110, 0.0004427343
      %v1112 = vsel %vm1111, %v1109, %v1106
      %v1113 = vadd.f32 %v1081, 1.0
      %v1114 = vlog2.pop %v1113
      %v1115 = vmul.f32 %v1114, 0.6931472
      %v1116 = vmul.f32 -0.5, %v1081
      %v1117 = vadd.f32 %v1116, 1.0
      %v1118 = vmul.f32 %v1117, %v1081
      %v1119 = vand.u32 2147483647, %v1081
      %vm1120 = vcmp.lt.f32.partialorder %v1119, 0.0004427343
      %v1121 = vsel %vm1120, %v1118, %v1115
      %v1122 = vadd.f32 %v1083, 1.0
      %v1123 = vlog2.pop %v1122
      %v1124 = vmul.f32 %v1123, 0.6931472
      %v1125 = vmul.f32 -0.5, %v1083
      %v1126 = vadd.f32 %v1125, 1.0
      %v1127 = vmul.f32 %v1126, %v1083
      %v1128 = vand.u32 2147483647, %v1083
      %vm1129 = vcmp.lt.f32.partialorder %v1128, 0.0004427343
      %v1130 = vsel %vm1129, %v1127, %v1124
      %v1131 = vadd.f32 %v1085, 1.0
      %v1132 = vlog2.pop %v1131
      %v1133 = vmul.f32 %v1132, 0.6931472
      %v1134 = vmul.f32 -0.5, %v1085
      %v1135 = vadd.f32 %v1134, 1.0
      %v1136 = vmul.f32 %v1135, %v1085
      %v1137 = vand.u32 2147483647, %v1085
      %vm1138 = vcmp.lt.f32.partialorder %v1137, 0.0004427343
      %v1139 = vsel %vm1138, %v1136, %v1133
      %v1140 = vmul.f32 %v1094, 0.01
      %v1141 = vmul.f32 %v1103, 0.01
      %v1142 = vmul.f32 %v1112, 0.01
      %v1143 = vmul.f32 %v1121, 0.01
      %v1144 = vmul.f32 %v1130, 0.01
      %v1145 = vmul.f32 %v1139, 0.01
      %v1146 = vsel %vm1068, %v1042, %v1140
      %v1147 = vsel %vm1069, %v1044, %v1141
      %v1148 = vsel %vm1070, %v1047, %v1142
      %v1149 = vsel %vm1071, %v1049, %v1143
      %v1150 = vsel %vm1072, %v1052, %v1144
      %v1151 = vsel %vm1073, %v1054, %v1145
      %v1152 = vpack.c.bf16 %v1147, %v1146
      %v1153 = vpack.c.bf16 %v1149, %v1148
      %v1154 = vpack.c.bf16 %v1151, %v1150
      %s1155 = scalar_lea.vmem %s4, 192
      %v1156 = vld [vmem:[%s1155] sm:$0xf]
      %v1157 = vld [vmem:[%s1155 + $0x4] sm:$0xf]
      %v1158 = vld [vmem:[%s1155 + $0x8] sm:$0xf]
      %v1159 = vld [vmem:[%s1155 + $0xc] sm:$0xf]
      %v1160 = vld [vmem:[%s1155 + $0x10] sm:$0xf]
      %v1161 = vld [vmem:[%s1155 + $0x14] sm:$0xf]
      %v1162 = vld [vmem:[%s1155 + $0x18] sm:$0xf]
      %v1163 = vld [vmem:[%s1155 + $0x1c] sm:$0xf]
      %v1164 = vld [vmem:[%s1155 + $0x20] sm:$0xf]
      %v1165 = vld [vmem:[%s1155 + $0x24] sm:$0xf]
      %v1166 = vld [vmem:[%s1155 + $0x28] sm:$0xf]
      %v1167 = vld [vmem:[%s1155 + $0x2c] sm:$0xf]
      %v1168 = vld [vmem:[%s1155 + $0x30] sm:$0xf]
      %v1169 = vld [vmem:[%s1155 + $0x34] sm:$0xf]
      %v1170 = vld [vmem:[%s1155 + $0x38] sm:$0xf]
      %v1171 = vld [vmem:[%s1155 + $0x3c] sm:$0xf]
      %s1172 = scalar_lea.vmem %s2, 8
      %v1173 = vld [vmem:[%s1172] sm:$0x3f]
      %v1175 = vsel %vm429, %v1173, 0
      %1177 = vmatpush.msra.mxu0 0.0
      %1178 = vmatpush.msra.mxu0 0.0
      %1179 = vmatpush.msra.mxu0 0.0
      %1180 = vmatpush.msra.mxu0 0.0
      %1181 = vmatpush.msra.mxu0 0.0
      %1182 = vmatpush.msra.mxu0 0.0
      %1183 = vmatpush.msra.mxu0 0.0
      %1184 = vmatpush.msra.mxu0 0.0
      %1185 = vmatpush.msra.mxu0 0.0
      %1186 = vmatpush.msra.mxu0 0.0
      %1187 = vmatpush.msra.mxu0 0.0
      %1188 = vmatpush.msra.mxu0 0.0
      %1189 = vmatpush.msra.mxu0 0.0
      %1190 = vmatpush.msra.mxu0 0.0
      %1191 = vmatpush.msra.mxu0 0.0
      %1192 = vmatpush.msra.mxu0 %v1175
      %1193 = vmatmul.f32.gmra.mxu0 %v412
      %v1194 = vpop.f32.mrf.mxu0
      %v1195 = vadd.f32 0.0, %v1194
      %1196 = vmatmul.f32.gmra.mxu0 %v415
      %v1197 = vpop.f32.mrf.mxu0
      %v1198 = vadd.f32 0.0, %v1197
      %1199 = vmatmul.f32.gmra.mxu0 %v418
      %v1200 = vpop.f32.mrf.mxu0
      %v1201 = vadd.f32 0.0, %v1200
      %1202 = vmatmul.f32.gmra.mxu0 %v421
      %v1203 = vpop.f32.mrf.mxu0
      %v1204 = vadd.f32 0.0, %v1203
      %1205 = vmatmul.f32.gmra.mxu0 %v424
      %v1206 = vpop.f32.mrf.mxu0
      %v1207 = vadd.f32 0.0, %v1206
      %1208 = vmatmul.f32.gmra.mxu0 %v427
      %v1209 = vpop.f32.mrf.mxu0
      %v1210 = vadd.f32 0.0, %v1209
      %1211 = vdwg.mxu0
      %v1228 = vunpack.c.l.b16 %v1156
      %v1229 = vunpack.c.l.b16 %v1157
      %v1230 = vunpack.c.l.b16 %v1158
      %v1231 = vunpack.c.l.b16 %v1159
      %v1232 = vunpack.c.l.b16 %v1160
      %v1233 = vunpack.c.l.b16 %v1161
      %v1234 = vunpack.c.l.b16 %v1162
      %v1235 = vunpack.c.l.b16 %v1163
      %v1236 = vunpack.c.l.b16 %v1164
      %v1237 = vunpack.c.l.b16 %v1165
      %v1238 = vunpack.c.l.b16 %v1166
      %v1239 = vunpack.c.l.b16 %v1167
      %v1240 = vunpack.c.l.b16 %v1168
      %v1241 = vunpack.c.l.b16 %v1169
      %v1242 = vunpack.c.l.b16 %v1170
      %v1243 = vunpack.c.l.b16 %v1171
      %v1244 = vpack.c.b16 %v1229, %v1228
      %v1245 = vpack.c.b16 %v1231, %v1230
      %v1246 = vpack.c.b16 %v1233, %v1232
      %v1247 = vpack.c.b16 %v1235, %v1234
      %v1248 = vpack.c.b16 %v1237, %v1236
      %v1249 = vpack.c.b16 %v1239, %v1238
      %v1250 = vpack.c.b16 %v1241, %v1240
      %v1251 = vpack.c.b16 %v1243, %v1242
      %1260 = vmatpush.bf16.msra.mxu0 %v1251
      %1261 = vmatpush.bf16.msra.mxu0 %v1250
      %1262 = vmatpush.bf16.msra.mxu0 %v1249
      %1263 = vmatpush.bf16.msra.mxu0 %v1248
      %1264 = vmatpush.bf16.msra.mxu0 %v1247
      %1265 = vmatpush.bf16.msra.mxu0 %v1246
      %1266 = vmatpush.bf16.msra.mxu0 %v1245
      %1267 = vmatpush.bf16.msra.mxu0 %v1244
      %1268 = vmatmul.bf16.gmra.mxu0 %v1152
      %v1269 = vpop.f32.mrf.mxu0
      %v1270 = vadd.f32 %v1195, %v1269
      %v1271 = vpop.f32.mrf.mxu0
      %v1272 = vadd.f32 %v1198, %v1271
      %1273 = vmatmul.bf16.gmra.mxu0 %v1153
      %v1274 = vpop.f32.mrf.mxu0
      %v1275 = vadd.f32 %v1201, %v1274
      %v1276 = vpop.f32.mrf.mxu0
      %v1277 = vadd.f32 %v1204, %v1276
      %1278 = vmatmul.bf16.gmra.mxu0 %v1154
      %v1279 = vpop.f32.mrf.mxu0
      %v1280 = vadd.f32 %v1207, %v1279
      %v1281 = vpop.f32.mrf.mxu0
      %v1282 = vadd.f32 %v1210, %v1281
      %1283 = vdwg.mxu0
      %s1284 = scalar_lea.vmem %s3, 96
      %v1285 = vld [vmem:[%s1284] sm:$0xff]
      %v1286 = vld [vmem:[%s1284 + $0x8] sm:$0xff]
      %v1287 = vld [vmem:[%s1284 + $0x10] sm:$0xff]
      %v1288 = vld [vmem:[%s1284 + $0x18] sm:$0xff]
      %v1289 = vld [vmem:[%s1284 + $0x20] sm:$0xff]
      %v1290 = vld [vmem:[%s1284 + $0x28] sm:$0xff]
      %v1291 = vld [vmem:[%s1284 + $0x30] sm:$0xff]
      %v1292 = vld [vmem:[%s1284 + $0x38] sm:$0xff]
      %v1293 = vld [vmem:[%s1284 + $0x40] sm:$0xff]
      %v1294 = vld [vmem:[%s1284 + $0x48] sm:$0xff]
      %v1295 = vld [vmem:[%s1284 + $0x50] sm:$0xff]
      %v1296 = vld [vmem:[%s1284 + $0x58] sm:$0xff]
      %1297 = vmatpush.msra.mxu0 0.0
      %1298 = vmatpush.msra.mxu0 0.0
      %1299 = vmatpush.msra.mxu0 0.0
      %1300 = vmatpush.msra.mxu0 0.0
      %1301 = vmatpush.msra.mxu0 %v1296
      %1302 = vmatpush.msra.mxu0 %v1295
      %1303 = vmatpush.msra.mxu0 %v1294
      %1304 = vmatpush.msra.mxu0 %v1293
      %1305 = vmatpush.msra.mxu0 %v1292
      %1306 = vmatpush.msra.mxu0 %v1291
      %1307 = vmatpush.msra.mxu0 %v1290
      %1308 = vmatpush.msra.mxu0 %v1289
      %1309 = vmatpush.msra.mxu0 %v1288
      %1310 = vmatpush.msra.mxu0 %v1287
      %1311 = vmatpush.msra.mxu0 %v1286
      %1312 = vmatpush.msra.mxu0 %v1285
      %1313 = vmatmul.f32.gmra.mxu0 %v358
      %v1314 = vpop.f32.mrf.mxu0
      %v1315 = vadd.f32 0.0, %v1314
      %1316 = vmatmul.f32.gmra.mxu0 %v361
      %v1317 = vpop.f32.mrf.mxu0
      %v1318 = vadd.f32 0.0, %v1317
      %1319 = vmatmul.f32.gmra.mxu0 %v364
      %v1320 = vpop.f32.mrf.mxu0
      %v1321 = vadd.f32 0.0, %v1320
      %1322 = vmatmul.f32.gmra.mxu0 %v367
      %v1323 = vpop.f32.mrf.mxu0
      %v1324 = vadd.f32 0.0, %v1323
      %1325 = vmatmul.f32.gmra.mxu0 %v370
      %v1326 = vpop.f32.mrf.mxu0
      %v1327 = vadd.f32 0.0, %v1326
      %1328 = vmatmul.f32.gmra.mxu0 %v373
      %v1329 = vpop.f32.mrf.mxu0
      %v1330 = vadd.f32 0.0, %v1329
      %1331 = vdwg.mxu0
      %v1332 = vadd.f32 %v1270, %v1315
      %v1333 = vadd.f32 %v1272, %v1318
      %v1334 = vadd.f32 %v1275, %v1321
      %v1335 = vadd.f32 %v1277, %v1324
      %v1336 = vadd.f32 %v1280, %v1327
      %v1337 = vadd.f32 %v1282, %v1330
      %s1338 = scalar_lea.vmem %s6, 4
      %v1339 = vld [vmem:[%s1338] sm:$0x1]
      %v1341 = vperm.slane %v1339, 0
      %v1343 = vadd.f32 %v1332, %v1341
      %v1344 = vadd.f32 %v1333, %v1341
      %v1345 = vadd.f32 %v1334, %v1341
      %v1346 = vadd.f32 %v1335, %v1341
      %v1347 = vadd.f32 %v1336, %v1341
      %v1348 = vadd.f32 %v1337, %v1341
      %v1349 = vmul.f32 %v1343, 100.0
      %v1350 = vmul.f32 %v1344, 100.0
      %v1351 = vmul.f32 %v1345, 100.0
      %v1352 = vmul.f32 %v1346, 100.0
      %v1353 = vmul.f32 %v1347, 100.0
      %v1354 = vmul.f32 %v1348, 100.0
      %v1355 = vmin.f32 %v1349, 20.0
      %v1356 = vmin.f32 %v1350, 20.0
      %v1357 = vmin.f32 %v1351, 20.0
      %v1358 = vmin.f32 %v1352, 20.0
      %v1359 = vmin.f32 %v1353, 20.0
      %v1360 = vmin.f32 %v1354, 20.0
      %vm1361 = vcmp.gt.f32.partialorder %v1349, 20.0
      %vm1362 = vcmp.gt.f32.partialorder %v1350, 20.0
      %vm1363 = vcmp.gt.f32.partialorder %v1351, 20.0
      %vm1364 = vcmp.gt.f32.partialorder %v1352, 20.0
      %vm1365 = vcmp.gt.f32.partialorder %v1353, 20.0
      %vm1366 = vcmp.gt.f32.partialorder %v1354, 20.0
      %v1367 = vmul.f32 %v1355, 1.442695
      %v1368 = vpow.pop %v1367
      %v1369 = vmul.f32 %v1356, 1.442695
      %v1370 = vpow.pop %v1369
      %v1371 = vmul.f32 %v1357, 1.442695
      %v1372 = vpow.pop %v1371
      %v1373 = vmul.f32 %v1358, 1.442695
      %v1374 = vpow.pop %v1373
      %v1375 = vmul.f32 %v1359, 1.442695
      %v1376 = vpow.pop %v1375
      %v1377 = vmul.f32 %v1360, 1.442695
      %v1378 = vpow.pop %v1377
      %v1379 = vadd.f32 %v1368, 1.0
      %v1380 = vlog2.pop %v1379
      %v1381 = vmul.f32 %v1380, 0.6931472
      %v1382 = vmul.f32 -0.5, %v1368
      %v1383 = vadd.f32 %v1382, 1.0
      %v1384 = vmul.f32 %v1383, %v1368
      %v1385 = vand.u32 2147483647, %v1368
      %vm1386 = vcmp.lt.f32.partialorder %v1385, 0.0004427343
      %v1387 = vsel %vm1386, %v1384, %v1381
      %v1388 = vadd.f32 %v1370, 1.0
      %v1389 = vlog2.pop %v1388
      %v1390 = vmul.f32 %v1389, 0.6931472
      %v1391 = vmul.f32 -0.5, %v1370
      %v1392 = vadd.f32 %v1391, 1.0
      %v1393 = vmul.f32 %v1392, %v1370
      %v1394 = vand.u32 2147483647, %v1370
      %vm1395 = vcmp.lt.f32.partialorder %v1394, 0.0004427343
      %v1396 = vsel %vm1395, %v1393, %v1390
      %v1397 = vadd.f32 %v1372, 1.0
      %v1398 = vlog2.pop %v1397
      %v1399 = vmul.f32 %v1398, 0.6931472
      %v1400 = vmul.f32 -0.5, %v1372
      %v1401 = vadd.f32 %v1400, 1.0
      %v1402 = vmul.f32 %v1401, %v1372
      %v1403 = vand.u32 2147483647, %v1372
      %vm1404 = vcmp.lt.f32.partialorder %v1403, 0.0004427343
      %v1405 = vsel %vm1404, %v1402, %v1399
      %v1406 = vadd.f32 %v1374, 1.0
      %v1407 = vlog2.pop %v1406
      %v1408 = vmul.f32 %v1407, 0.6931472
      %v1409 = vmul.f32 -0.5, %v1374
      %v1410 = vadd.f32 %v1409, 1.0
      %v1411 = vmul.f32 %v1410, %v1374
      %v1412 = vand.u32 2147483647, %v1374
      %vm1413 = vcmp.lt.f32.partialorder %v1412, 0.0004427343
      %v1414 = vsel %vm1413, %v1411, %v1408
      %v1415 = vadd.f32 %v1376, 1.0
      %v1416 = vlog2.pop %v1415
      %v1417 = vmul.f32 %v1416, 0.6931472
      %v1418 = vmul.f32 -0.5, %v1376
      %v1419 = vadd.f32 %v1418, 1.0
      %v1420 = vmul.f32 %v1419, %v1376
      %v1421 = vand.u32 2147483647, %v1376
      %vm1422 = vcmp.lt.f32.partialorder %v1421, 0.0004427343
      %v1423 = vsel %vm1422, %v1420, %v1417
      %v1424 = vadd.f32 %v1378, 1.0
      %v1425 = vlog2.pop %v1424
      %v1426 = vmul.f32 %v1425, 0.6931472
      %v1427 = vmul.f32 -0.5, %v1378
      %v1428 = vadd.f32 %v1427, 1.0
      %v1429 = vmul.f32 %v1428, %v1378
      %v1430 = vand.u32 2147483647, %v1378
      %vm1431 = vcmp.lt.f32.partialorder %v1430, 0.0004427343
      %v1432 = vsel %vm1431, %v1429, %v1426
      %v1433 = vmul.f32 %v1387, 0.01
      %v1434 = vmul.f32 %v1396, 0.01
      %v1435 = vmul.f32 %v1405, 0.01
      %v1436 = vmul.f32 %v1414, 0.01
      %v1437 = vmul.f32 %v1423, 0.01
      %v1438 = vmul.f32 %v1432, 0.01
      %v1439 = vsel %vm1361, %v1343, %v1433
      %v1440 = vsel %vm1362, %v1344, %v1434
      %v1441 = vsel %vm1363, %v1345, %v1435
      %v1442 = vsel %vm1364, %v1346, %v1436
      %v1443 = vsel %vm1365, %v1347, %v1437
      %v1444 = vsel %vm1366, %v1348, %v1438
      %v1445 = vpack.c.bf16 %v1440, %v1439
      %v1446 = vpack.c.bf16 %v1442, %v1441
      %v1447 = vpack.c.bf16 %v1444, %v1443
      %s1448 = scalar_lea.vmem %s4, 256
      %v1449 = vld [vmem:[%s1448] sm:$0xf]
      %v1450 = vld [vmem:[%s1448 + $0x4] sm:$0xf]
      %v1451 = vld [vmem:[%s1448 + $0x8] sm:$0xf]
      %v1452 = vld [vmem:[%s1448 + $0xc] sm:$0xf]
      %v1453 = vld [vmem:[%s1448 + $0x10] sm:$0xf]
      %v1454 = vld [vmem:[%s1448 + $0x14] sm:$0xf]
      %v1455 = vld [vmem:[%s1448 + $0x18] sm:$0xf]
      %v1456 = vld [vmem:[%s1448 + $0x1c] sm:$0xf]
      %v1457 = vld [vmem:[%s1448 + $0x20] sm:$0xf]
      %v1458 = vld [vmem:[%s1448 + $0x24] sm:$0xf]
      %v1459 = vld [vmem:[%s1448 + $0x28] sm:$0xf]
      %v1460 = vld [vmem:[%s1448 + $0x2c] sm:$0xf]
      %v1461 = vld [vmem:[%s1448 + $0x30] sm:$0xf]
      %v1462 = vld [vmem:[%s1448 + $0x34] sm:$0xf]
      %v1463 = vld [vmem:[%s1448 + $0x38] sm:$0xf]
      %v1464 = vld [vmem:[%s1448 + $0x3c] sm:$0xf]
      %s1465 = scalar_lea.vmem %s6, 5
      %v1466 = vld [vmem:[%s1465] sm:$0x1]
      %v1468 = vperm.slane %v1466, 0
      %v1486 = vunpack.c.l.b16 %v1449
      %v1487 = vunpack.c.l.b16 %v1450
      %v1488 = vunpack.c.l.b16 %v1451
      %v1489 = vunpack.c.l.b16 %v1452
      %v1490 = vunpack.c.l.b16 %v1453
      %v1491 = vunpack.c.l.b16 %v1454
      %v1492 = vunpack.c.l.b16 %v1455
      %v1493 = vunpack.c.l.b16 %v1456
      %v1494 = vunpack.c.l.b16 %v1457
      %v1495 = vunpack.c.l.b16 %v1458
      %v1496 = vunpack.c.l.b16 %v1459
      %v1497 = vunpack.c.l.b16 %v1460
      %v1498 = vunpack.c.l.b16 %v1461
      %v1499 = vunpack.c.l.b16 %v1462
      %v1500 = vunpack.c.l.b16 %v1463
      %v1501 = vunpack.c.l.b16 %v1464
      %v1502 = vpack.c.b16 %v1487, %v1486
      %v1503 = vpack.c.b16 %v1489, %v1488
      %v1504 = vpack.c.b16 %v1491, %v1490
      %v1505 = vpack.c.b16 %v1493, %v1492
      %v1506 = vpack.c.b16 %v1495, %v1494
      %v1507 = vpack.c.b16 %v1497, %v1496
      %v1508 = vpack.c.b16 %v1499, %v1498
      %v1509 = vpack.c.b16 %v1501, %v1500
      %1518 = vmatpush.bf16.msra.mxu0 %v1509
      %1519 = vmatpush.bf16.msra.mxu0 %v1508
      %1520 = vmatpush.bf16.msra.mxu0 %v1507
      %1521 = vmatpush.bf16.msra.mxu0 %v1506
      %1522 = vmatpush.bf16.msra.mxu0 %v1505
      %1523 = vmatpush.bf16.msra.mxu0 %v1504
      %1524 = vmatpush.bf16.msra.mxu0 %v1503
      %1525 = vmatpush.bf16.msra.mxu0 %v1502
      %1526 = vmatmul.bf16.gmra.mxu0 %v1445
      %v1527 = vpop.f32.mrf.mxu0
      %v1528 = vadd.f32 %v1468, %v1527
      %v1529 = vpop.f32.mrf.mxu0
      %v1530 = vadd.f32 %v1468, %v1529
      %1531 = vmatmul.bf16.gmra.mxu0 %v1446
      %v1532 = vpop.f32.mrf.mxu0
      %v1533 = vadd.f32 %v1468, %v1532
      %v1534 = vpop.f32.mrf.mxu0
      %v1535 = vadd.f32 %v1468, %v1534
      %1536 = vmatmul.bf16.gmra.mxu0 %v1447
      %v1537 = vpop.f32.mrf.mxu0
      %v1538 = vadd.f32 %v1468, %v1537
      %v1539 = vpop.f32.mrf.mxu0
      %v1540 = vadd.f32 %v1468, %v1539
      %1541 = vdwg.mxu0
      %v1542 = vmul.f32 %v1528, 100.0
      %v1543 = vmul.f32 %v1530, 100.0
      %v1544 = vmul.f32 %v1533, 100.0
      %v1545 = vmul.f32 %v1535, 100.0
      %v1546 = vmul.f32 %v1538, 100.0
      %v1547 = vmul.f32 %v1540, 100.0
      %v1548 = vmin.f32 %v1542, 20.0
      %v1549 = vmin.f32 %v1543, 20.0
      %v1550 = vmin.f32 %v1544, 20.0
      %v1551 = vmin.f32 %v1545, 20.0
      %v1552 = vmin.f32 %v1546, 20.0
      %v1553 = vmin.f32 %v1547, 20.0
      %vm1554 = vcmp.gt.f32.partialorder %v1542, 20.0
      %vm1555 = vcmp.gt.f32.partialorder %v1543, 20.0
      %vm1556 = vcmp.gt.f32.partialorder %v1544, 20.0
      %vm1557 = vcmp.gt.f32.partialorder %v1545, 20.0
      %vm1558 = vcmp.gt.f32.partialorder %v1546, 20.0
      %vm1559 = vcmp.gt.f32.partialorder %v1547, 20.0
      %v1560 = vmul.f32 %v1548, 1.442695
      %v1561 = vpow.pop %v1560
      %v1562 = vmul.f32 %v1549, 1.442695
      %v1563 = vpow.pop %v1562
      %v1564 = vmul.f32 %v1550, 1.442695
      %v1565 = vpow.pop %v1564
      %v1566 = vmul.f32 %v1551, 1.442695
      %v1567 = vpow.pop %v1566
      %v1568 = vmul.f32 %v1552, 1.442695
      %v1569 = vpow.pop %v1568
      %v1570 = vmul.f32 %v1553, 1.442695
      %v1571 = vpow.pop %v1570
      %v1572 = vadd.f32 %v1561, 1.0
      %v1573 = vlog2.pop %v1572
      %v1574 = vmul.f32 %v1573, 0.6931472
      %v1575 = vmul.f32 -0.5, %v1561
      %v1576 = vadd.f32 %v1575, 1.0
      %v1577 = vmul.f32 %v1576, %v1561
      %v1578 = vand.u32 2147483647, %v1561
      %vm1579 = vcmp.lt.f32.partialorder %v1578, 0.0004427343
      %v1580 = vsel %vm1579, %v1577, %v1574
      %v1581 = vadd.f32 %v1563, 1.0
      %v1582 = vlog2.pop %v1581
      %v1583 = vmul.f32 %v1582, 0.6931472
      %v1584 = vmul.f32 -0.5, %v1563
      %v1585 = vadd.f32 %v1584, 1.0
      %v1586 = vmul.f32 %v1585, %v1563
      %v1587 = vand.u32 2147483647, %v1563
      %vm1588 = vcmp.lt.f32.partialorder %v1587, 0.0004427343
      %v1589 = vsel %vm1588, %v1586, %v1583
      %v1590 = vadd.f32 %v1565, 1.0
      %v1591 = vlog2.pop %v1590
      %v1592 = vmul.f32 %v1591, 0.6931472
      %v1593 = vmul.f32 -0.5, %v1565
      %v1594 = vadd.f32 %v1593, 1.0
      %v1595 = vmul.f32 %v1594, %v1565
      %v1596 = vand.u32 2147483647, %v1565
      %vm1597 = vcmp.lt.f32.partialorder %v1596, 0.0004427343
      %v1598 = vsel %vm1597, %v1595, %v1592
      %v1599 = vadd.f32 %v1567, 1.0
      %v1600 = vlog2.pop %v1599
      %v1601 = vmul.f32 %v1600, 0.6931472
      %v1602 = vmul.f32 -0.5, %v1567
      %v1603 = vadd.f32 %v1602, 1.0
      %v1604 = vmul.f32 %v1603, %v1567
      %v1605 = vand.u32 2147483647, %v1567
      %vm1606 = vcmp.lt.f32.partialorder %v1605, 0.0004427343
      %v1607 = vsel %vm1606, %v1604, %v1601
      %v1608 = vadd.f32 %v1569, 1.0
      %v1609 = vlog2.pop %v1608
      %v1610 = vmul.f32 %v1609, 0.6931472
      %v1611 = vmul.f32 -0.5, %v1569
      %v1612 = vadd.f32 %v1611, 1.0
      %v1613 = vmul.f32 %v1612, %v1569
      %v1614 = vand.u32 2147483647, %v1569
      %vm1615 = vcmp.lt.f32.partialorder %v1614, 0.0004427343
      %v1616 = vsel %vm1615, %v1613, %v1610
      %v1617 = vadd.f32 %v1571, 1.0
      %v1618 = vlog2.pop %v1617
      %v1619 = vmul.f32 %v1618, 0.6931472
      %v1620 = vmul.f32 -0.5, %v1571
      %v1621 = vadd.f32 %v1620, 1.0
      %v1622 = vmul.f32 %v1621, %v1571
      %v1623 = vand.u32 2147483647, %v1571
      %vm1624 = vcmp.lt.f32.partialorder %v1623, 0.0004427343
      %v1625 = vsel %vm1624, %v1622, %v1619
      %v1626 = vmul.f32 %v1580, 0.01
      %v1627 = vmul.f32 %v1589, 0.01
      %v1628 = vmul.f32 %v1598, 0.01
      %v1629 = vmul.f32 %v1607, 0.01
      %v1630 = vmul.f32 %v1616, 0.01
      %v1631 = vmul.f32 %v1625, 0.01
      %v1632 = vsel %vm1554, %v1528, %v1626
      %v1633 = vsel %vm1555, %v1530, %v1627
      %v1634 = vsel %vm1556, %v1533, %v1628
      %v1635 = vsel %vm1557, %v1535, %v1629
      %v1636 = vsel %vm1558, %v1538, %v1630
      %v1637 = vsel %vm1559, %v1540, %v1631
      %v1638 = vpack.c.bf16 %v1633, %v1632
      %v1639 = vpack.c.bf16 %v1635, %v1634
      %v1640 = vpack.c.bf16 %v1637, %v1636
      %s1641 = scalar_lea.vmem %s4, 320
      %v1642 = vld [vmem:[%s1641] sm:$0xf]
      %v1643 = vld [vmem:[%s1641 + $0x4] sm:$0xf]
      %v1644 = vld [vmem:[%s1641 + $0x8] sm:$0xf]
      %v1645 = vld [vmem:[%s1641 + $0xc] sm:$0xf]
      %v1646 = vld [vmem:[%s1641 + $0x10] sm:$0xf]
      %v1647 = vld [vmem:[%s1641 + $0x14] sm:$0xf]
      %v1648 = vld [vmem:[%s1641 + $0x18] sm:$0xf]
      %v1649 = vld [vmem:[%s1641 + $0x1c] sm:$0xf]
      %v1650 = vld [vmem:[%s1641 + $0x20] sm:$0xf]
      %v1651 = vld [vmem:[%s1641 + $0x24] sm:$0xf]
      %v1652 = vld [vmem:[%s1641 + $0x28] sm:$0xf]
      %v1653 = vld [vmem:[%s1641 + $0x2c] sm:$0xf]
      %v1654 = vld [vmem:[%s1641 + $0x30] sm:$0xf]
      %v1655 = vld [vmem:[%s1641 + $0x34] sm:$0xf]
      %v1656 = vld [vmem:[%s1641 + $0x38] sm:$0xf]
      %v1657 = vld [vmem:[%s1641 + $0x3c] sm:$0xf]
      %s1658 = scalar_lea.vmem %s6, 6
      %v1659 = vld [vmem:[%s1658] sm:$0x1]
      %v1661 = vperm.slane %v1659, 0
      %v1679 = vunpack.c.l.b16 %v1642
      %v1680 = vunpack.c.l.b16 %v1643
      %v1681 = vunpack.c.l.b16 %v1644
      %v1682 = vunpack.c.l.b16 %v1645
      %v1683 = vunpack.c.l.b16 %v1646
      %v1684 = vunpack.c.l.b16 %v1647
      %v1685 = vunpack.c.l.b16 %v1648
      %v1686 = vunpack.c.l.b16 %v1649
      %v1687 = vunpack.c.l.b16 %v1650
      %v1688 = vunpack.c.l.b16 %v1651
      %v1689 = vunpack.c.l.b16 %v1652
      %v1690 = vunpack.c.l.b16 %v1653
      %v1691 = vunpack.c.l.b16 %v1654
      %v1692 = vunpack.c.l.b16 %v1655
      %v1693 = vunpack.c.l.b16 %v1656
      %v1694 = vunpack.c.l.b16 %v1657
      %v1695 = vpack.c.b16 %v1680, %v1679
      %v1696 = vpack.c.b16 %v1682, %v1681
      %v1697 = vpack.c.b16 %v1684, %v1683
      %v1698 = vpack.c.b16 %v1686, %v1685
      %v1699 = vpack.c.b16 %v1688, %v1687
      %v1700 = vpack.c.b16 %v1690, %v1689
      %v1701 = vpack.c.b16 %v1692, %v1691
      %v1702 = vpack.c.b16 %v1694, %v1693
      %1711 = vmatpush.bf16.msra.mxu0 %v1702
      %1712 = vmatpush.bf16.msra.mxu0 %v1701
      %1713 = vmatpush.bf16.msra.mxu0 %v1700
      %1714 = vmatpush.bf16.msra.mxu0 %v1699
      %1715 = vmatpush.bf16.msra.mxu0 %v1698
      %1716 = vmatpush.bf16.msra.mxu0 %v1697
      %1717 = vmatpush.bf16.msra.mxu0 %v1696
      %1718 = vmatpush.bf16.msra.mxu0 %v1695
      %1719 = vmatmul.bf16.gmra.mxu0 %v1638
      %v1720 = vpop.f32.mrf.mxu0
      %v1721 = vadd.f32 %v1661, %v1720
      %v1722 = vpop.f32.mrf.mxu0
      %v1723 = vadd.f32 %v1661, %v1722
      %1724 = vmatmul.bf16.gmra.mxu0 %v1639
      %v1725 = vpop.f32.mrf.mxu0
      %v1726 = vadd.f32 %v1661, %v1725
      %v1727 = vpop.f32.mrf.mxu0
      %v1728 = vadd.f32 %v1661, %v1727
      %1729 = vmatmul.bf16.gmra.mxu0 %v1640
      %v1730 = vpop.f32.mrf.mxu0
      %v1731 = vadd.f32 %v1661, %v1730
      %v1732 = vpop.f32.mrf.mxu0
      %v1733 = vadd.f32 %v1661, %v1732
      %1734 = vdwg.mxu0
      %v1735 = vmul.f32 %v1721, 100.0
      %v1736 = vmul.f32 %v1723, 100.0
      %v1737 = vmul.f32 %v1726, 100.0
      %v1738 = vmul.f32 %v1728, 100.0
      %v1739 = vmul.f32 %v1731, 100.0
      %v1740 = vmul.f32 %v1733, 100.0
      %v1741 = vmin.f32 %v1735, 20.0
      %v1742 = vmin.f32 %v1736, 20.0
      %v1743 = vmin.f32 %v1737, 20.0
      %v1744 = vmin.f32 %v1738, 20.0
      %v1745 = vmin.f32 %v1739, 20.0
      %v1746 = vmin.f32 %v1740, 20.0
      %vm1747 = vcmp.gt.f32.partialorder %v1735, 20.0
      %vm1748 = vcmp.gt.f32.partialorder %v1736, 20.0
      %vm1749 = vcmp.gt.f32.partialorder %v1737, 20.0
      %vm1750 = vcmp.gt.f32.partialorder %v1738, 20.0
      %vm1751 = vcmp.gt.f32.partialorder %v1739, 20.0
      %vm1752 = vcmp.gt.f32.partialorder %v1740, 20.0
      %v1753 = vmul.f32 %v1741, 1.442695
      %v1754 = vpow.pop %v1753
      %v1755 = vmul.f32 %v1742, 1.442695
      %v1756 = vpow.pop %v1755
      %v1757 = vmul.f32 %v1743, 1.442695
      %v1758 = vpow.pop %v1757
      %v1759 = vmul.f32 %v1744, 1.442695
      %v1760 = vpow.pop %v1759
      %v1761 = vmul.f32 %v1745, 1.442695
      %v1762 = vpow.pop %v1761
      %v1763 = vmul.f32 %v1746, 1.442695
      %v1764 = vpow.pop %v1763
      %v1765 = vadd.f32 %v1754, 1.0
      %v1766 = vlog2.pop %v1765
      %v1767 = vmul.f32 %v1766, 0.6931472
      %v1768 = vmul.f32 -0.5, %v1754
      %v1769 = vadd.f32 %v1768, 1.0
      %v1770 = vmul.f32 %v1769, %v1754
      %v1771 = vand.u32 2147483647, %v1754
      %vm1772 = vcmp.lt.f32.partialorder %v1771, 0.0004427343
      %v1773 = vsel %vm1772, %v1770, %v1767
      %v1774 = vadd.f32 %v1756, 1.0
      %v1775 = vlog2.pop %v1774
      %v1776 = vmul.f32 %v1775, 0.6931472
      %v1777 = vmul.f32 -0.5, %v1756
      %v1778 = vadd.f32 %v1777, 1.0
      %v1779 = vmul.f32 %v1778, %v1756
      %v1780 = vand.u32 2147483647, %v1756
      %vm1781 = vcmp.lt.f32.partialorder %v1780, 0.0004427343
      %v1782 = vsel %vm1781, %v1779, %v1776
      %v1783 = vadd.f32 %v1758, 1.0
      %v1784 = vlog2.pop %v1783
      %v1785 = vmul.f32 %v1784, 0.6931472
      %v1786 = vmul.f32 -0.5, %v1758
      %v1787 = vadd.f32 %v1786, 1.0
      %v1788 = vmul.f32 %v1787, %v1758
      %v1789 = vand.u32 2147483647, %v1758
      %vm1790 = vcmp.lt.f32.partialorder %v1789, 0.0004427343
      %v1791 = vsel %vm1790, %v1788, %v1785
      %v1792 = vadd.f32 %v1760, 1.0
      %v1793 = vlog2.pop %v1792
      %v1794 = vmul.f32 %v1793, 0.6931472
      %v1795 = vmul.f32 -0.5, %v1760
      %v1796 = vadd.f32 %v1795, 1.0
      %v1797 = vmul.f32 %v1796, %v1760
      %v1798 = vand.u32 2147483647, %v1760
      %vm1799 = vcmp.lt.f32.partialorder %v1798, 0.0004427343
      %v1800 = vsel %vm1799, %v1797, %v1794
      %v1801 = vadd.f32 %v1762, 1.0
      %v1802 = vlog2.pop %v1801
      %v1803 = vmul.f32 %v1802, 0.6931472
      %v1804 = vmul.f32 -0.5, %v1762
      %v1805 = vadd.f32 %v1804, 1.0
      %v1806 = vmul.f32 %v1805, %v1762
      %v1807 = vand.u32 2147483647, %v1762
      %vm1808 = vcmp.lt.f32.partialorder %v1807, 0.0004427343
      %v1809 = vsel %vm1808, %v1806, %v1803
      %v1810 = vadd.f32 %v1764, 1.0
      %v1811 = vlog2.pop %v1810
      %v1812 = vmul.f32 %v1811, 0.6931472
      %v1813 = vmul.f32 -0.5, %v1764
      %v1814 = vadd.f32 %v1813, 1.0
      %v1815 = vmul.f32 %v1814, %v1764
      %v1816 = vand.u32 2147483647, %v1764
      %vm1817 = vcmp.lt.f32.partialorder %v1816, 0.0004427343
      %v1818 = vsel %vm1817, %v1815, %v1812
      %v1819 = vmul.f32 %v1773, 0.01
      %v1820 = vmul.f32 %v1782, 0.01
      %v1821 = vmul.f32 %v1791, 0.01
      %v1822 = vmul.f32 %v1800, 0.01
      %v1823 = vmul.f32 %v1809, 0.01
      %v1824 = vmul.f32 %v1818, 0.01
      %v1825 = vsel %vm1747, %v1721, %v1819
      %v1826 = vsel %vm1748, %v1723, %v1820
      %v1827 = vsel %vm1749, %v1726, %v1821
      %v1828 = vsel %vm1750, %v1728, %v1822
      %v1829 = vsel %vm1751, %v1731, %v1823
      %v1830 = vsel %vm1752, %v1733, %v1824
      %v1831 = vpack.c.bf16 %v1826, %v1825
      %v1832 = vpack.c.bf16 %v1828, %v1827
      %v1833 = vpack.c.bf16 %v1830, %v1829
      %s1834 = scalar_lea.vmem %s4, 384
      %v1835 = vld [vmem:[%s1834] sm:$0xf]
      %v1836 = vld [vmem:[%s1834 + $0x4] sm:$0xf]
      %v1837 = vld [vmem:[%s1834 + $0x8] sm:$0xf]
      %v1838 = vld [vmem:[%s1834 + $0xc] sm:$0xf]
      %v1839 = vld [vmem:[%s1834 + $0x10] sm:$0xf]
      %v1840 = vld [vmem:[%s1834 + $0x14] sm:$0xf]
      %v1841 = vld [vmem:[%s1834 + $0x18] sm:$0xf]
      %v1842 = vld [vmem:[%s1834 + $0x1c] sm:$0xf]
      %v1843 = vld [vmem:[%s1834 + $0x20] sm:$0xf]
      %v1844 = vld [vmem:[%s1834 + $0x24] sm:$0xf]
      %v1845 = vld [vmem:[%s1834 + $0x28] sm:$0xf]
      %v1846 = vld [vmem:[%s1834 + $0x2c] sm:$0xf]
      %v1847 = vld [vmem:[%s1834 + $0x30] sm:$0xf]
      %v1848 = vld [vmem:[%s1834 + $0x34] sm:$0xf]
      %v1849 = vld [vmem:[%s1834 + $0x38] sm:$0xf]
      %v1850 = vld [vmem:[%s1834 + $0x3c] sm:$0xf]
      %s1851 = scalar_lea.vmem %s6, 7
      %v1852 = vld [vmem:[%s1851] sm:$0x1]
      %v1854 = vperm.slane %v1852, 0
      %v1872 = vunpack.c.l.b16 %v1835
      %v1873 = vunpack.c.l.b16 %v1836
      %v1874 = vunpack.c.l.b16 %v1837
      %v1875 = vunpack.c.l.b16 %v1838
      %v1876 = vunpack.c.l.b16 %v1839
      %v1877 = vunpack.c.l.b16 %v1840
      %v1878 = vunpack.c.l.b16 %v1841
      %v1879 = vunpack.c.l.b16 %v1842
      %v1880 = vunpack.c.l.b16 %v1843
      %v1881 = vunpack.c.l.b16 %v1844
      %v1882 = vunpack.c.l.b16 %v1845
      %v1883 = vunpack.c.l.b16 %v1846
      %v1884 = vunpack.c.l.b16 %v1847
      %v1885 = vunpack.c.l.b16 %v1848
      %v1886 = vunpack.c.l.b16 %v1849
      %v1887 = vunpack.c.l.b16 %v1850
      %v1888 = vpack.c.b16 %v1873, %v1872
      %v1889 = vpack.c.b16 %v1875, %v1874
      %v1890 = vpack.c.b16 %v1877, %v1876
      %v1891 = vpack.c.b16 %v1879, %v1878
      %v1892 = vpack.c.b16 %v1881, %v1880
      %v1893 = vpack.c.b16 %v1883, %v1882
      %v1894 = vpack.c.b16 %v1885, %v1884
      %v1895 = vpack.c.b16 %v1887, %v1886
      %1904 = vmatpush.bf16.msra.mxu0 %v1895
      %1905 = vmatpush.bf16.msra.mxu0 %v1894
      %1906 = vmatpush.bf16.msra.mxu0 %v1893
      %1907 = vmatpush.bf16.msra.mxu0 %v1892
      %1908 = vmatpush.bf16.msra.mxu0 %v1891
      %1909 = vmatpush.bf16.msra.mxu0 %v1890
      %1910 = vmatpush.bf16.msra.mxu0 %v1889
      %1911 = vmatpush.bf16.msra.mxu0 %v1888
      %1912 = vmatmul.bf16.gmra.mxu0 %v1831
      %v1913 = vpop.f32.mrf.mxu0
      %v1914 = vadd.f32 %v1854, %v1913
      %v1915 = vpop.f32.mrf.mxu0
      %v1916 = vadd.f32 %v1854, %v1915
      %1917 = vmatmul.bf16.gmra.mxu0 %v1832
      %v1918 = vpop.f32.mrf.mxu0
      %v1919 = vadd.f32 %v1854, %v1918
      %v1920 = vpop.f32.mrf.mxu0
      %v1921 = vadd.f32 %v1854, %v1920
      %1922 = vmatmul.bf16.gmra.mxu0 %v1833
      %v1923 = vpop.f32.mrf.mxu0
      %v1924 = vadd.f32 %v1854, %v1923
      %v1925 = vpop.f32.mrf.mxu0
      %v1926 = vadd.f32 %v1854, %v1925
      %1927 = vdwg.mxu0
      %v1928 = vmul.f32 %v1914, 100.0
      %v1929 = vmul.f32 %v1916, 100.0
      %v1930 = vmul.f32 %v1919, 100.0
      %v1931 = vmul.f32 %v1921, 100.0
      %v1932 = vmul.f32 %v1924, 100.0
      %v1933 = vmul.f32 %v1926, 100.0
      %v1934 = vmin.f32 %v1928, 20.0
      %v1935 = vmin.f32 %v1929, 20.0
      %v1936 = vmin.f32 %v1930, 20.0
      %v1937 = vmin.f32 %v1931, 20.0
      %v1938 = vmin.f32 %v1932, 20.0
      %v1939 = vmin.f32 %v1933, 20.0
      %vm1940 = vcmp.gt.f32.partialorder %v1928, 20.0
      %vm1941 = vcmp.gt.f32.partialorder %v1929, 20.0
      %vm1942 = vcmp.gt.f32.partialorder %v1930, 20.0
      %vm1943 = vcmp.gt.f32.partialorder %v1931, 20.0
      %vm1944 = vcmp.gt.f32.partialorder %v1932, 20.0
      %vm1945 = vcmp.gt.f32.partialorder %v1933, 20.0
      %v1946 = vmul.f32 %v1934, 1.442695
      %v1947 = vpow.pop %v1946
      %v1948 = vmul.f32 %v1935, 1.442695
      %v1949 = vpow.pop %v1948
      %v1950 = vmul.f32 %v1936, 1.442695
      %v1951 = vpow.pop %v1950
      %v1952 = vmul.f32 %v1937, 1.442695
      %v1953 = vpow.pop %v1952
      %v1954 = vmul.f32 %v1938, 1.442695
      %v1955 = vpow.pop %v1954
      %v1956 = vmul.f32 %v1939, 1.442695
      %v1957 = vpow.pop %v1956
      %v1958 = vadd.f32 %v1947, 1.0
      %v1959 = vlog2.pop %v1958
      %v1960 = vmul.f32 %v1959, 0.6931472
      %v1961 = vmul.f32 -0.5, %v1947
      %v1962 = vadd.f32 %v1961, 1.0
      %v1963 = vmul.f32 %v1962, %v1947
      %v1964 = vand.u32 2147483647, %v1947
      %vm1965 = vcmp.lt.f32.partialorder %v1964, 0.0004427343
      %v1966 = vsel %vm1965, %v1963, %v1960
      %v1967 = vadd.f32 %v1949, 1.0
      %v1968 = vlog2.pop %v1967
      %v1969 = vmul.f32 %v1968, 0.6931472
      %v1970 = vmul.f32 -0.5, %v1949
      %v1971 = vadd.f32 %v1970, 1.0
      %v1972 = vmul.f32 %v1971, %v1949
      %v1973 = vand.u32 2147483647, %v1949
      %vm1974 = vcmp.lt.f32.partialorder %v1973, 0.0004427343
      %v1975 = vsel %vm1974, %v1972, %v1969
      %v1976 = vadd.f32 %v1951, 1.0
      %v1977 = vlog2.pop %v1976
      %v1978 = vmul.f32 %v1977, 0.6931472
      %v1979 = vmul.f32 -0.5, %v1951
      %v1980 = vadd.f32 %v1979, 1.0
      %v1981 = vmul.f32 %v1980, %v1951
      %v1982 = vand.u32 2147483647, %v1951
      %vm1983 = vcmp.lt.f32.partialorder %v1982, 0.0004427343
      %v1984 = vsel %vm1983, %v1981, %v1978
      %v1985 = vadd.f32 %v1953, 1.0
      %v1986 = vlog2.pop %v1985
      %v1987 = vmul.f32 %v1986, 0.6931472
      %v1988 = vmul.f32 -0.5, %v1953
      %v1989 = vadd.f32 %v1988, 1.0
      %v1990 = vmul.f32 %v1989, %v1953
      %v1991 = vand.u32 2147483647, %v1953
      %vm1992 = vcmp.lt.f32.partialorder %v1991, 0.0004427343
      %v1993 = vsel %vm1992, %v1990, %v1987
      %v1994 = vadd.f32 %v1955, 1.0
      %v1995 = vlog2.pop %v1994
      %v1996 = vmul.f32 %v1995, 0.6931472
      %v1997 = vmul.f32 -0.5, %v1955
      %v1998 = vadd.f32 %v1997, 1.0
      %v1999 = vmul.f32 %v1998, %v1955
      %v2000 = vand.u32 2147483647, %v1955
      %vm2001 = vcmp.lt.f32.partialorder %v2000, 0.0004427343
      %v2002 = vsel %vm2001, %v1999, %v1996
      %v2003 = vadd.f32 %v1957, 1.0
      %v2004 = vlog2.pop %v2003
      %v2005 = vmul.f32 %v2004, 0.6931472
      %v2006 = vmul.f32 -0.5, %v1957
      %v2007 = vadd.f32 %v2006, 1.0
      %v2008 = vmul.f32 %v2007, %v1957
      %v2009 = vand.u32 2147483647, %v1957
      %vm2010 = vcmp.lt.f32.partialorder %v2009, 0.0004427343
      %v2011 = vsel %vm2010, %v2008, %v2005
      %v2012 = vmul.f32 %v1966, 0.01
      %v2013 = vmul.f32 %v1975, 0.01
      %v2014 = vmul.f32 %v1984, 0.01
      %v2015 = vmul.f32 %v1993, 0.01
      %v2016 = vmul.f32 %v2002, 0.01
      %v2017 = vmul.f32 %v2011, 0.01
      %v2018 = vsel %vm1940, %v1914, %v2012
      %v2019 = vsel %vm1941, %v1916, %v2013
      %v2020 = vsel %vm1942, %v1919, %v2014
      %v2021 = vsel %vm1943, %v1921, %v2015
      %v2022 = vsel %vm1944, %v1924, %v2016
      %v2023 = vsel %vm1945, %v1926, %v2017
      %v2024 = vld [vmem:[%s5] sm:$0xff]
      %v2025 = vld [vmem:[%s5 + $0x8] sm:$0xff]
      %v2026 = vld [vmem:[%s5 + $0x10] sm:$0xff]
      %v2027 = vld [vmem:[%s5 + $0x18] sm:$0xff]
      %v2028 = vld [vmem:[%s5 + $0x20] sm:$0xff]
      %v2029 = vld [vmem:[%s5 + $0x28] sm:$0xff]
      %v2030 = vld [vmem:[%s5 + $0x30] sm:$0xff]
      %v2031 = vld [vmem:[%s5 + $0x38] sm:$0xff]
      %v2032 = vld [vmem:[%s5 + $0x40] sm:$0xff]
      %v2033 = vld [vmem:[%s5 + $0x48] sm:$0xff]
      %v2034 = vld [vmem:[%s5 + $0x50] sm:$0xff]
      %v2035 = vld [vmem:[%s5 + $0x58] sm:$0xff]
      %v2036 = vld [vmem:[%s5 + $0x60] sm:$0xff]
      %v2037 = vld [vmem:[%s5 + $0x68] sm:$0xff]
      %v2038 = vld [vmem:[%s5 + $0x70] sm:$0xff]
      %v2039 = vld [vmem:[%s5 + $0x78] sm:$0xff]
      %v2040 = vld [vmem:[%s7] sm:$0x1]
      %v2042 = vperm.slane %v2040, 0
      %2044 = vmatpush.msra.mxu0 %v2039
      %2045 = vmatpush.msra.mxu0 %v2038
      %2046 = vmatpush.msra.mxu0 %v2037
      %2047 = vmatpush.msra.mxu0 %v2036
      %2048 = vmatpush.msra.mxu0 %v2035
      %2049 = vmatpush.msra.mxu0 %v2034
      %2050 = vmatpush.msra.mxu0 %v2033
      %2051 = vmatpush.msra.mxu0 %v2032
      %2052 = vmatpush.msra.mxu0 %v2031
      %2053 = vmatpush.msra.mxu0 %v2030
      %2054 = vmatpush.msra.mxu0 %v2029
      %2055 = vmatpush.msra.mxu0 %v2028
      %2056 = vmatpush.msra.mxu0 %v2027
      %2057 = vmatpush.msra.mxu0 %v2026
      %2058 = vmatpush.msra.mxu0 %v2025
      %2059 = vmatpush.msra.mxu0 %v2024
      %2060 = vmatmul.f32.gmra.mxu0 %v2018
      %v2061 = vpop.f32.mrf.mxu0
      %v2062 = vadd.f32 %v2042, %v2061
      %2063 = vmatmul.f32.gmra.mxu0 %v2019
      %v2064 = vpop.f32.mrf.mxu0
      %v2065 = vadd.f32 %v2042, %v2064
      %2066 = vmatmul.f32.gmra.mxu0 %v2020
      %v2067 = vpop.f32.mrf.mxu0
      %v2068 = vadd.f32 %v2042, %v2067
      %2069 = vmatmul.f32.gmra.mxu0 %v2021
      %v2070 = vpop.f32.mrf.mxu0
      %v2071 = vadd.f32 %v2042, %v2070
      %2072 = vmatmul.f32.gmra.mxu0 %v2022
      %v2073 = vpop.f32.mrf.mxu0
      %v2074 = vadd.f32 %v2042, %v2073
      %2075 = vmatmul.f32.gmra.mxu0 %v2023
      %v2076 = vpop.f32.mrf.mxu0
      %v2077 = vadd.f32 %v2042, %v2076
      %2078 = vdwg.mxu0
      %vm2079 = vcmask 64512
      %2080 = vst.msk [vmem:[%s329] sm:$0xff] %vm2079, %v2062
      %2081 = vst.msk [vmem:[%s329 + $0x8] sm:$0xff] %vm2079, %v2065
      %2082 = vst.msk [vmem:[%s329 + $0x10] sm:$0xff] %vm2079, %v2068
      %2083 = vst.msk [vmem:[%s329 + $0x18] sm:$0xff] %vm2079, %v2071
      %2084 = vst.msk [vmem:[%s329 + $0x20] sm:$0xff] %vm2079, %v2074
      %2085 = vst.msk [vmem:[%s329 + $0x28] sm:$0xff] %vm2079, %v2077
      %s2086 = smul.u32 6, %s19
      %p2087 = scmp.lt.s32.totalorder %s2086, 41
      %s2088 = scalar_select %p2087, %s2086, 41
      %s2089 = smul.addr %s2088, 8
      %s2090 = scalar_lea.vmem %s8, %s2089
      // Predicated region
      $region53: #{deformation_network_forward.1} parent=51 // pred_check
        %p2091 = pneg %p215
      $region54: #{deformation_network_forward.1} parent=51 // pred_check_branch
        %2093 = sbr.rel (%p2091) target = $region56
      $region55: #{deformation_network_forward.1} parent=51 // pred_region
        %s2094 = smul.u32 6, %s19
      $region56: #{deformation_network_forward.1} parent=51 // pred_fallthru
        _
    $region52: #{deformation_network_forward.1} parent=5 // pred_fallthru
      _
    %p2095 = scmp.le.s32.totalorder 2, %s14
    // Predicated region
    $region57: #{deformation_network_forward.1} parent=5 // pred_check
      %p2096 = pneg %p2095
    $region58: #{deformation_network_forward.1} parent=5 // pred_check_branch
      %2098 = sbr.rel (%p2096) target = $region60
    $region59: #{deformation_network_forward.1} parent=5 // pred_region
      %s2099 = ssub.s32 %s14, 2
      // Predicated region
      $region61: #{deformation_network_forward.1} parent=59 // pred_check
        %p2100 = pneg %p221
      $region62: #{deformation_network_forward.1} parent=59 // pred_check_branch
        %2102 = sbr.rel (%p2100) target = $region64
      $region63: #{deformation_network_forward.1} parent=59 // pred_region
        %s2103 = smul.u32 6, %s20
        %p2104 = scmp.lt.s32.totalorder %s2103, 41
        %s2105 = scalar_select %p2104, %s2103, 41
        %s2106 = smul.addr %s2105, 8
        %s2107 = scalar_lea.vmem %s8, %s2106
      $region64: #{deformation_network_forward.1} parent=59 // pred_fallthru
        _
    $region60: #{deformation_network_forward.1} parent=5 // pred_fallthru
      _
  $region6: #{deformation_network_forward.1} parent=0 // loop_footer
    %s18 = sadd.s32 1, %s14
  $region7: #{deformation_network_forward.1} parent=0 // loop_footer_branch
    %13 = sbr.rel target = $region3
  $region8: #{deformation_network_forward.1} parent=0 // loop_exit
    _

</llo_original>
